<compile_context>
chip_gen: v5e
topology: v5e:2x2
jax: 0.10.0
libtpu: 0.0.40
codegen_flags: <defaults>
</compile_context>

<pallas_src>
import functools

import jax
import jax.numpy as jnp
from jax.experimental import pallas as pl
from jax.experimental.pallas import tpu as pltpu


def _round_up(x, m):
    return ((x + m - 1) // m) * m


def _layernorm(s, g, b, eps):
    # LayerNorm over the flattened hidden (H, W) == the lane axis.
    mu = jnp.mean(s, axis=-1, keepdims=True)
    c = s - mu
    var = jnp.mean(c * c, axis=-1, keepdims=True)
    return c * jax.lax.rsqrt(var + eps) * g + b


def _conv3x3_patches(pad_ref, x_flat, w_sp, pad_off):
    """9 shifted (and column-masked) copies of x_flat for a 3x3 conv, pad=1.

    x_flat: (rows, H*W) -- rows are channels, lanes are flattened (H, W).
    pad_ref: zero-padded VMEM staging scratch, wide enough for every shift.
    Returns patches in tap order ky*3+kx (PyTorch kernel layout).
    """
    rows, n = x_flat.shape
    pad_ref[...] = jnp.zeros(pad_ref.shape, pad_ref.dtype)
    pad_ref[:, pad_off:pad_off + n] = x_flat
    j = jax.lax.broadcasted_iota(jnp.int32, (rows, n), 1) % w_sp
    ok_left = j >= 1            # source column j-1 exists (dx == -1)
    ok_right = j <= w_sp - 2    # source column j+1 exists (dx == +1)
    patches = []
    for dy in (-1, 0, 1):
        for dx in (-1, 0, 1):
            shift = dy * w_sp + dx
            p = pad_ref[:, pad_off + shift: pad_off + shift + n]
            if dx == -1:
                p = jnp.where(ok_left, p, 0.0)
            elif dx == 1:
                p = jnp.where(ok_right, p, 0.0)
            patches.append(p)
    return patches


def _fused_layer_kernel(x_ref, wqkv_ref, bqkv_ref, aggr_w_ref, aggr_b_ref,
                        ln1_g_ref, ln1_b_ref, ffnn_w_ref, ffnn_b_ref,
                        ln2_g_ref, ln2_b_ref, o_ref, padg_ref, padf_ref,
                        *, dk, w_sp, pad_g, pad_f, eps):
    L = x_ref.shape[1]
    x = x_ref[0]                                                  # (L, D) f32

    # ---- self-attention: fused QKV projection (bf16 on MXU, f32 accumulate) --
    qkv = jnp.dot(x.astype(jnp.bfloat16), wqkv_ref[...],
                  preferred_element_type=jnp.float32) + bqkv_ref[...]
    q = qkv[:, 0 * dk:1 * dk]
    k = qkv[:, 1 * dk:2 * dk]
    v = qkv[:, 2 * dk:3 * dk]
    s = jax.lax.dot_general(q, k, (((1,), (1,)), ((), ())),
                            preferred_element_type=jnp.float32)
    s = s * (float(dk) ** -0.5)
    p = jnp.exp(s - jnp.max(s, axis=-1, keepdims=True))
    attn = p * pl.reciprocal(jnp.sum(p, axis=-1, keepdims=True), approx=True)
    y_att = jnp.dot(attn, v, preferred_element_type=jnp.float32)  # (L, dk)

    # ---- grouped 3x3 conv (L -> 4L, groups=L) on flat (H//2 * W//2) lanes ----
    ww = w_sp // 2
    patches_g = _conv3x3_patches(padg_ref, y_att, ww, pad_g)      # 9 x (L, dk)
    wg = aggr_w_ref[...]                                          # (L, 36)
    bg = aggr_b_ref[...]                                          # (L, 4)
    pieces = []
    for o in range(4):
        acc = jnp.zeros((L, dk), jnp.float32)
        for t in range(9):
            acc = acc + wg[:, 4 * t + o:4 * t + o + 1] * patches_g[t]
        pieces.append(acc + bg[:, o:o + 1])
    # Lane-concat == torch.reshape((..., 4L, H//2, W//2) -> (..., L, H, W)).
    y = jnp.concatenate(pieces, axis=-1)                          # (L, D)

    # ---- residual + LayerNorm1 ----
    y = _layernorm(y + x, ln1_g_ref[...], ln1_b_ref[...], eps)

    # ---- dense 3x3 conv (ffnn): im2col + single bf16 MXU matmul ----
    patches_f = _conv3x3_patches(padf_ref, y, w_sp, pad_f)        # 9 x (L, D)
    col = jnp.concatenate(patches_f, axis=0).astype(jnp.bfloat16)  # (9L, D)
    z = jnp.dot(ffnn_w_ref[...], col,
                preferred_element_type=jnp.float32) + ffnn_b_ref[...]

    # ---- residual + LayerNorm2, lane-dense (L, 256) store ----
    o_ref[0] = _layernorm(y + z, ln2_g_ref[...], ln2_b_ref[...], eps)


class TransformerMatrixLayerPallas:
    def __init__(self, hidden_shape, maxlen, key):
        H, W = hidden_shape
        assert H % 2 == 0 and W % 2 == 0
        D = H * W
        Dk = D // 4
        self.hidden_shape = hidden_shape
        self.maxlen = maxlen
        ks = jax.random.split(key, 8)
        s = 0.05
        # self-attention projections (invented layer, see NOTE) — fused QKV.
        wq = jax.random.normal(ks[0], (D, Dk)) * s
        wk = jax.random.normal(ks[1], (D, Dk)) * s
        wv = jax.random.normal(ks[2], (D, Dk)) * s
        self.wqkv = jnp.concatenate([wq, wk, wv], axis=1).astype(jnp.bfloat16)
        self.bqkv = jnp.zeros((1, 3 * Dk), jnp.float32)
        # self_attention_aggr: Conv2d(L, 4L, 3, padding=1, groups=L).
        # PyTorch weight (4L, 1, 3, 3) -> (L, 36), column index (ky*3+kx)*4 + o.
        aggr_w = jax.random.normal(ks[3], (4 * maxlen, 1, 3, 3)) * s
        self.aggr_w = jnp.transpose(aggr_w.reshape(maxlen, 4, 3, 3),
                                    (0, 2, 3, 1)).reshape(maxlen, 36).astype(jnp.float32)
        self.aggr_b = (jax.random.normal(ks[4], (maxlen, 4)) * s).astype(jnp.float32)
        # layer_norm1 / layer_norm2 over hidden_shape (flattened to H*W lanes).
        self.ln1_g = jnp.ones((1, D), jnp.float32)
        self.ln1_b = jnp.zeros((1, D), jnp.float32)
        self.ln2_g = jnp.ones((1, D), jnp.float32)
        self.ln2_b = jnp.zeros((1, D), jnp.float32)
        # ffnn: Conv2d(L, L, 3, padding=1); PyTorch weight (L, L, 3, 3)
        #   -> im2col weight (Cout, 9*Cin), column index (ky*3+kx)*Cin + cin.
        ffnn_w = jax.random.normal(ks[5], (maxlen, maxlen, 3, 3)) * s
        self.ffnn_w = jnp.transpose(ffnn_w, (0, 2, 3, 1)).reshape(
            maxlen, 9 * maxlen).astype(jnp.bfloat16)
        self.ffnn_b = (jax.random.normal(ks[6], (maxlen, 1)) * s).astype(jnp.float32)

    def __call__(self, x):
        # x: (B, maxlen, H, W) -- single leading batch dim supported.
        B, L, H, W = x.shape
        assert (H, W) == self.hidden_shape and L == self.maxlen
        D = H * W
        Dk = D // 4
        ww = W // 2
        # Padded staging widths for the in-kernel flat 3x3 tap shifts.
        pad_g = _round_up(ww + 1, 8)
        pad_f = _round_up(W + 1, 8)
        padg_w = _round_up(pad_g + Dk + ww + 1, 128)
        padf_w = _round_up(pad_f + D + W + 1, 128)

        x_flat = x.reshape(B, L, D).astype(jnp.float32)
        kern = functools.partial(_fused_layer_kernel, dk=Dk, w_sp=W,
                                 pad_g=pad_g, pad_f=pad_f, eps=1e-5)
        out = pl.pallas_call(
            kern,
            out_shape=jax.ShapeDtypeStruct((B, L, D), jnp.float32),
            grid=(B,),
            in_specs=[
                pl.BlockSpec((1, L, D), lambda b: (b, 0, 0)),       # x (flat)
                pl.BlockSpec((D, 3 * Dk), lambda b: (0, 0)),        # Wqkv (bf16)
                pl.BlockSpec((1, 3 * Dk), lambda b: (0, 0)),        # bqkv
                pl.BlockSpec((L, 36), lambda b: (0, 0)),            # grouped-conv w
                pl.BlockSpec((L, 4), lambda b: (0, 0)),             # grouped-conv b
                pl.BlockSpec((1, D), lambda b: (0, 0)),             # ln1 gamma
                pl.BlockSpec((1, D), lambda b: (0, 0)),             # ln1 beta
                pl.BlockSpec((L, 9 * L), lambda b: (0, 0)),         # ffnn w (im2col, bf16)
                pl.BlockSpec((L, 1), lambda b: (0, 0)),             # ffnn b
                pl.BlockSpec((1, D), lambda b: (0, 0)),             # ln2 gamma
                pl.BlockSpec((1, D), lambda b: (0, 0)),             # ln2 beta
            ],
            out_specs=pl.BlockSpec((1, L, D), lambda b: (b, 0, 0)),
            scratch_shapes=[
                pltpu.VMEM((L, padg_w), jnp.float32),               # grouped-conv pad
                pltpu.VMEM((L, padf_w), jnp.float32),               # ffnn-conv pad
            ],
            compiler_params=pltpu.CompilerParams(
                dimension_semantics=("parallel",)),
        )(x_flat, self.wqkv, self.bqkv, self.aggr_w, self.aggr_b,
          self.ln1_g, self.ln1_b, self.ffnn_w, self.ffnn_b,
          self.ln2_g, self.ln2_b)
        return out.reshape(B, L, H, W)


if __name__ == "__main__":
    key = jax.random.PRNGKey(0)
    k_x, k_p = jax.random.split(key)

    B, maxlen, H, W = 2, 8, 16, 16
    hidden_shape = (H, W)

    x = jax.random.normal(k_x, (B, maxlen, H, W), dtype=jnp.float32)
    layer = TransformerMatrixLayerPallas(hidden_shape, maxlen, k_p)

    out = layer(x)
    out = jax.block_until_ready(out)
    assert out.shape == (B, maxlen, H, W)
    assert bool(jnp.all(jnp.isfinite(out)))
    print("KERNEL_OK")
</pallas_src>

<mosaic_0001>
module attributes {stable_mosaic.version = 11 : i64} {
  func.func @_fused_layer_kernel(%arg0: i32, %arg1: memref<1x8x256xf32, #tpu.memory_space<vmem>>, %arg2: memref<256x192xbf16, #tpu.memory_space<vmem>>, %arg3: memref<1x192xf32, #tpu.memory_space<vmem>>, %arg4: memref<8x36xf32, #tpu.memory_space<vmem>>, %arg5: memref<8x4xf32, #tpu.memory_space<vmem>>, %arg6: memref<1x256xf32, #tpu.memory_space<vmem>>, %arg7: memref<1x256xf32, #tpu.memory_space<vmem>>, %arg8: memref<8x72xbf16, #tpu.memory_space<vmem>>, %arg9: memref<8x1xf32, #tpu.memory_space<vmem>>, %arg10: memref<1x256xf32, #tpu.memory_space<vmem>>, %arg11: memref<1x256xf32, #tpu.memory_space<vmem>>, %arg12: memref<1x8x256xf32, #tpu.memory_space<vmem>>, %arg13: memref<8x128xf32, #tpu.memory_space<vmem>>, %arg14: memref<8x384xf32, #tpu.memory_space<vmem>>) attributes {dimension_semantics = [#tpu.dimension_semantics<parallel>], iteration_bounds = array<i64: 2>, scalar_prefetch = 0 : i64, scratch_operands = 2 : i64, tpu.core_type = #tpu.core_type<tc>, window_params = [{transform_indices = @transform_0, window_bounds = array<i64: 1, 8, 256>}, {pipeline_mode = #tpu.pipeline_mode<synchronous>, transform_indices = @transform_1, window_bounds = array<i64: 256, 192>}, {pipeline_mode = #tpu.pipeline_mode<synchronous>, transform_indices = @transform_2, window_bounds = array<i64: 1, 192>}, {pipeline_mode = #tpu.pipeline_mode<synchronous>, transform_indices = @transform_3, window_bounds = array<i64: 8, 36>}, {pipeline_mode = #tpu.pipeline_mode<synchronous>, transform_indices = @transform_4, window_bounds = array<i64: 8, 4>}, {pipeline_mode = #tpu.pipeline_mode<synchronous>, transform_indices = @transform_5, window_bounds = array<i64: 1, 256>}, {pipeline_mode = #tpu.pipeline_mode<synchronous>, transform_indices = @transform_6, window_bounds = array<i64: 1, 256>}, {pipeline_mode = #tpu.pipeline_mode<synchronous>, transform_indices = @transform_7, window_bounds = array<i64: 8, 72>}, {pipeline_mode = #tpu.pipeline_mode<synchronous>, transform_indices = @transform_8, window_bounds = array<i64: 8, 1>}, {pipeline_mode = #tpu.pipeline_mode<synchronous>, transform_indices = @transform_9, window_bounds = array<i64: 1, 256>}, {pipeline_mode = #tpu.pipeline_mode<synchronous>, transform_indices = @transform_10, window_bounds = array<i64: 1, 256>}, {transform_indices = @transform_11, window_bounds = array<i64: 1, 8, 256>}]} {
    %c0 = arith.constant 0 : index
    %c0_0 = arith.constant 0 : index
    %c0_1 = arith.constant 0 : index
    %0 = vector.load %arg1[%c0, %c0_0, %c0_1] : memref<1x8x256xf32, #tpu.memory_space<vmem>>, vector<1x8x256xf32>
    %1 = vector.shape_cast %0 : vector<1x8x256xf32> to vector<8x256xf32>
    %2 = arith.truncf %1 : vector<8x256xf32> to vector<8x256xbf16>
    %c0_2 = arith.constant 0 : index
    %c0_3 = arith.constant 0 : index
    %3 = vector.load %arg2[%c0_2, %c0_3] : memref<256x192xbf16, #tpu.memory_space<vmem>>, vector<256x192xbf16>
    %cst = arith.constant dense<0.000000e+00> : vector<8x192xf32>
    %4 = tpu.matmul %2, %3, %cst {dimension_numbers = #tpu.dot_dimension_numbers<[1], [0], [0], [1], [0, 0, 1, 1], [], []>} : vector<8x256xbf16>, vector<256x192xbf16>, vector<8x192xf32> -> vector<8x192xf32>
    %c0_4 = arith.constant 0 : index
    %c0_5 = arith.constant 0 : index
    %5 = vector.load %arg3[%c0_4, %c0_5] : memref<1x192xf32, #tpu.memory_space<vmem>>, vector<1x192xf32>
    %6 = vector.broadcast %5 : vector<1x192xf32> to vector<8x192xf32>
    %7 = arith.addf %4, %6 : vector<8x192xf32>
    %8 = vector.extract_strided_slice %7 {offsets = [0, 0], sizes = [8, 64], strides = [1, 1]} : vector<8x192xf32> to vector<8x64xf32>
    %9 = vector.extract_strided_slice %7 {offsets = [0, 64], sizes = [8, 64], strides = [1, 1]} : vector<8x192xf32> to vector<8x64xf32>
    %10 = vector.extract_strided_slice %7 {offsets = [0, 128], sizes = [8, 64], strides = [1, 1]} : vector<8x192xf32> to vector<8x64xf32>
    %cst_6 = arith.constant dense<0.000000e+00> : vector<8x8xf32>
    %11 = tpu.matmul %8, %9, %cst_6 {dimension_numbers = #tpu.dot_dimension_numbers<[1], [1], [0], [0], [0, 0, 1, 0], [], []>} : vector<8x64xf32>, vector<8x64xf32>, vector<8x8xf32> -> vector<8x8xf32>
    %cst_7 = arith.constant 1.250000e-01 : f32
    %12 = vector.broadcast %cst_7 : f32 to vector<8x8xf32>
    %13 = arith.mulf %11, %12 : vector<8x8xf32>
    %cst_8 = arith.constant dense<0xFF800000> : vector<8xf32>
    %14 = vector.multi_reduction <maximumf>, %13, %cst_8 [1] : vector<8x8xf32> to vector<8xf32>
    %15 = vector.shape_cast %14 : vector<8xf32> to vector<8x1xf32>
    %16 = vector.broadcast %15 : vector<8x1xf32> to vector<8x8xf32>
    %17 = arith.subf %13, %16 : vector<8x8xf32>
    %18 = math.exp %17 : vector<8x8xf32>
    %cst_9 = arith.constant dense<0.000000e+00> : vector<8xf32>
    %19 = vector.multi_reduction <add>, %18, %cst_9 [1] : vector<8x8xf32> to vector<8xf32>
    %20 = vector.shape_cast %19 : vector<8xf32> to vector<8x1xf32>
    %21 = tpu.reciprocal %20 {approx = true} : vector<8x1xf32> -> vector<8x1xf32>
    %22 = vector.broadcast %21 : vector<8x1xf32> to vector<8x8xf32>
    %23 = arith.mulf %18, %22 : vector<8x8xf32>
    %cst_10 = arith.constant dense<0.000000e+00> : vector<8x64xf32>
    %24 = tpu.matmul %23, %10, %cst_10 {dimension_numbers = #tpu.dot_dimension_numbers<[1], [0], [0], [1], [0, 0, 1, 1], [], []>} : vector<8x8xf32>, vector<8x64xf32>, vector<8x64xf32> -> vector<8x64xf32>
    %cst_11 = arith.constant 0.000000e+00 : f32
    %25 = vector.broadcast %cst_11 : f32 to vector<8x128xf32>
    %c0_12 = arith.constant 0 : index
    %c0_13 = arith.constant 0 : index
    %26 = vector.load %arg13[%c0_12, %c0_13] : memref<8x128xf32, #tpu.memory_space<vmem>>, vector<8x128xf32>
    tpu.vector_store %arg13[%c0_12, %c0_13], %25 {strides = array<i32>} : memref<8x128xf32, #tpu.memory_space<vmem>>, vector<8x128xf32>,
    %c0_14 = arith.constant 0 : index
    %c16 = arith.constant 16 : index
    %27 = vector.load %arg13[%c0_14, %c16] : memref<8x128xf32, #tpu.memory_space<vmem>>, vector<8x64xf32>
    tpu.vector_store %arg13[%c0_14, %c16], %24 {strides = array<i32>} : memref<8x128xf32, #tpu.memory_space<vmem>>, vector<8x64xf32>,
    %28 = tpu.iota {dimensions = array<i32: 1>} : vector<8x64xi32>
    %c8_i32 = arith.constant 8 : i32
    %c0_i32 = arith.constant 0 : i32
    %29 = arith.cmpi eq, %c8_i32, %c0_i32 : i32
    %c1_i32 = arith.constant 1 : i32
    %30 = arith.select %29, %c1_i32, %c8_i32 : i32
    %31 = vector.broadcast %30 : i32 to vector<8x64xi32>
    %32 = arith.remsi %28, %31 : vector<8x64xi32>
    %c0_i32_15 = arith.constant 0 : i32
    %33 = vector.broadcast %c0_i32_15 : i32 to vector<8x64xi32>
    %34 = arith.cmpi ne, %32, %33 : vector<8x64xi32>
    %c0_i32_16 = arith.constant 0 : i32
    %35 = vector.broadcast %c0_i32_16 : i32 to vector<8x64xi32>
    %36 = arith.cmpi slt, %32, %35 : vector<8x64xi32>
    %c0_i32_17 = arith.constant 0 : i32
    %37 = arith.cmpi slt, %30, %c0_i32_17 : i32
    %38 = vector.broadcast %37 : i1 to vector<8x64xi1>
    %39 = vector.broadcast %38 : vector<8x64xi1> to vector<8x64xi1>
    %40 = arith.xori %36, %39 : vector<8x64xi1>
    %41 = arith.andi %40, %34 : vector<8x64xi1>
    %42 = vector.broadcast %30 : i32 to vector<8x64xi32>
    %43 = arith.addi %32, %42 : vector<8x64xi32>
    %44 = arith.select %41, %43, %32 : vector<8x64xi1>, vector<8x64xi32>
    %c1_i32_18 = arith.constant 1 : i32
    %45 = vector.broadcast %c1_i32_18 : i32 to vector<8x64xi32>
    %46 = arith.cmpi sge, %44, %45 : vector<8x64xi32>
    %c6_i32 = arith.constant 6 : i32
    %47 = vector.broadcast %c6_i32 : i32 to vector<8x64xi32>
    %48 = arith.cmpi sle, %44, %47 : vector<8x64xi32>
    %c0_19 = arith.constant 0 : index
    %c7 = arith.constant 7 : index
    %49 = vector.load %arg13[%c0_19, %c7] : memref<8x128xf32, #tpu.memory_space<vmem>>, vector<8x64xf32>
    %cst_20 = arith.constant 0.000000e+00 : f32
    %50 = vector.broadcast %cst_20 : f32 to vector<8x64xf32>
    %51 = arith.select %46, %49, %50 : vector<8x64xi1>, vector<8x64xf32>
    %c0_21 = arith.constant 0 : index
    %c8 = arith.constant 8 : index
    %52 = vector.load %arg13[%c0_21, %c8] : memref<8x128xf32, #tpu.memory_space<vmem>>, vector<8x64xf32>
    %c0_22 = arith.constant 0 : index
    %c9 = arith.constant 9 : index
    %53 = vector.load %arg13[%c0_22, %c9] : memref<8x128xf32, #tpu.memory_space<vmem>>, vector<8x64xf32>
    %cst_23 = arith.constant 0.000000e+00 : f32
    %54 = vector.broadcast %cst_23 : f32 to vector<8x64xf32>
    %55 = arith.select %48, %53, %54 : vector<8x64xi1>, vector<8x64xf32>
    %c0_24 = arith.constant 0 : index
    %c15 = arith.constant 15 : index
    %56 = vector.load %arg13[%c0_24, %c15] : memref<8x128xf32, #tpu.memory_space<vmem>>, vector<8x64xf32>
    %cst_25 = arith.constant 0.000000e+00 : f32
    %57 = vector.broadcast %cst_25 : f32 to vector<8x64xf32>
    %58 = arith.select %46, %56, %57 : vector<8x64xi1>, vector<8x64xf32>
    %c0_26 = arith.constant 0 : index
    %c16_27 = arith.constant 16 : index
    %59 = vector.load %arg13[%c0_26, %c16_27] : memref<8x128xf32, #tpu.memory_space<vmem>>, vector<8x64xf32>
    %c0_28 = arith.constant 0 : index
    %c17 = arith.constant 17 : index
    %60 = vector.load %arg13[%c0_28, %c17] : memref<8x128xf32, #tpu.memory_space<vmem>>, vector<8x64xf32>
    %cst_29 = arith.constant 0.000000e+00 : f32
    %61 = vector.broadcast %cst_29 : f32 to vector<8x64xf32>
    %62 = arith.select %48, %60, %61 : vector<8x64xi1>, vector<8x64xf32>
    %c0_30 = arith.constant 0 : index
    %c23 = arith.constant 23 : index
    %63 = vector.load %arg13[%c0_30, %c23] : memref<8x128xf32, #tpu.memory_space<vmem>>, vector<8x64xf32>
    %cst_31 = arith.constant 0.000000e+00 : f32
    %64 = vector.broadcast %cst_31 : f32 to vector<8x64xf32>
    %65 = arith.select %46, %63, %64 : vector<8x64xi1>, vector<8x64xf32>
    %c0_32 = arith.constant 0 : index
    %c24 = arith.constant 24 : index
    %66 = vector.load %arg13[%c0_32, %c24] : memref<8x128xf32, #tpu.memory_space<vmem>>, vector<8x64xf32>
    %c0_33 = arith.constant 0 : index
    %c25 = arith.constant 25 : index
    %67 = vector.load %arg13[%c0_33, %c25] : memref<8x128xf32, #tpu.memory_space<vmem>>, vector<8x64xf32>
    %cst_34 = arith.constant 0.000000e+00 : f32
    %68 = vector.broadcast %cst_34 : f32 to vector<8x64xf32>
    %69 = arith.select %48, %67, %68 : vector<8x64xi1>, vector<8x64xf32>
    %c0_35 = arith.constant 0 : index
    %c0_36 = arith.constant 0 : index
    %70 = vector.load %arg4[%c0_35, %c0_36] : memref<8x36xf32, #tpu.memory_space<vmem>>, vector<8x36xf32>
    %c0_37 = arith.constant 0 : index
    %c0_38 = arith.constant 0 : index
    %71 = vector.load %arg5[%c0_37, %c0_38] : memref<8x4xf32, #tpu.memory_space<vmem>>, vector<8x4xf32>
    %cst_39 = arith.constant 0.000000e+00 : f32
    %72 = vector.broadcast %cst_39 : f32 to vector<8x64xf32>
    %73 = vector.extract_strided_slice %70 {offsets = [0, 0], sizes = [8, 1], strides = [1, 1]} : vector<8x36xf32> to vector<8x1xf32>
    %74 = vector.broadcast %73 : vector<8x1xf32> to vector<8x64xf32>
    %75 = arith.mulf %74, %51 : vector<8x64xf32>
    %76 = arith.addf %72, %75 : vector<8x64xf32>
    %77 = vector.extract_strided_slice %70 {offsets = [0, 4], sizes = [8, 1], strides = [1, 1]} : vector<8x36xf32> to vector<8x1xf32>
    %78 = vector.broadcast %77 : vector<8x1xf32> to vector<8x64xf32>
    %79 = arith.mulf %78, %52 : vector<8x64xf32>
    %80 = arith.addf %76, %79 : vector<8x64xf32>
    %81 = vector.extract_strided_slice %70 {offsets = [0, 8], sizes = [8, 1], strides = [1, 1]} : vector<8x36xf32> to vector<8x1xf32>
    %82 = vector.broadcast %81 : vector<8x1xf32> to vector<8x64xf32>
    %83 = arith.mulf %82, %55 : vector<8x64xf32>
    %84 = arith.addf %80, %83 : vector<8x64xf32>
    %85 = vector.extract_strided_slice %70 {offsets = [0, 12], sizes = [8, 1], strides = [1, 1]} : vector<8x36xf32> to vector<8x1xf32>
    %86 = vector.broadcast %85 : vector<8x1xf32> to vector<8x64xf32>
    %87 = arith.mulf %86, %58 : vector<8x64xf32>
    %88 = arith.addf %84, %87 : vector<8x64xf32>
    %89 = vector.extract_strided_slice %70 {offsets = [0, 16], sizes = [8, 1], strides = [1, 1]} : vector<8x36xf32> to vector<8x1xf32>
    %90 = vector.broadcast %89 : vector<8x1xf32> to vector<8x64xf32>
    %91 = arith.mulf %90, %59 : vector<8x64xf32>
    %92 = arith.addf %88, %91 : vector<8x64xf32>
    %93 = vector.extract_strided_slice %70 {offsets = [0, 20], sizes = [8, 1], strides = [1, 1]} : vector<8x36xf32> to vector<8x1xf32>
    %94 = vector.broadcast %93 : vector<8x1xf32> to vector<8x64xf32>
    %95 = arith.mulf %94, %62 : vector<8x64xf32>
    %96 = arith.addf %92, %95 : vector<8x64xf32>
    %97 = vector.extract_strided_slice %70 {offsets = [0, 24], sizes = [8, 1], strides = [1, 1]} : vector<8x36xf32> to vector<8x1xf32>
    %98 = vector.broadcast %97 : vector<8x1xf32> to vector<8x64xf32>
    %99 = arith.mulf %98, %65 : vector<8x64xf32>
    %100 = arith.addf %96, %99 : vector<8x64xf32>
    %101 = vector.extract_strided_slice %70 {offsets = [0, 28], sizes = [8, 1], strides = [1, 1]} : vector<8x36xf32> to vector<8x1xf32>
    %102 = vector.broadcast %101 : vector<8x1xf32> to vector<8x64xf32>
    %103 = arith.mulf %102, %66 : vector<8x64xf32>
    %104 = arith.addf %100, %103 : vector<8x64xf32>
    %105 = vector.extract_strided_slice %70 {offsets = [0, 32], sizes = [8, 1], strides = [1, 1]} : vector<8x36xf32> to vector<8x1xf32>
    %106 = vector.broadcast %105 : vector<8x1xf32> to vector<8x64xf32>
    %107 = arith.mulf %106, %69 : vector<8x64xf32>
    %108 = arith.addf %104, %107 : vector<8x64xf32>
    %109 = vector.extract_strided_slice %71 {offsets = [0, 0], sizes = [8, 1], strides = [1, 1]} : vector<8x4xf32> to vector<8x1xf32>
    %110 = vector.broadcast %109 : vector<8x1xf32> to vector<8x64xf32>
    %111 = arith.addf %108, %110 : vector<8x64xf32>
    %cst_40 = arith.constant 0.000000e+00 : f32
    %112 = vector.broadcast %cst_40 : f32 to vector<8x64xf32>
    %113 = vector.extract_strided_slice %70 {offsets = [0, 1], sizes = [8, 1], strides = [1, 1]} : vector<8x36xf32> to vector<8x1xf32>
    %114 = vector.broadcast %113 : vector<8x1xf32> to vector<8x64xf32>
    %115 = arith.mulf %114, %51 : vector<8x64xf32>
    %116 = arith.addf %112, %115 : vector<8x64xf32>
    %117 = vector.extract_strided_slice %70 {offsets = [0, 5], sizes = [8, 1], strides = [1, 1]} : vector<8x36xf32> to vector<8x1xf32>
    %118 = vector.broadcast %117 : vector<8x1xf32> to vector<8x64xf32>
    %119 = arith.mulf %118, %52 : vector<8x64xf32>
    %120 = arith.addf %116, %119 : vector<8x64xf32>
    %121 = vector.extract_strided_slice %70 {offsets = [0, 9], sizes = [8, 1], strides = [1, 1]} : vector<8x36xf32> to vector<8x1xf32>
    %122 = vector.broadcast %121 : vector<8x1xf32> to vector<8x64xf32>
    %123 = arith.mulf %122, %55 : vector<8x64xf32>
    %124 = arith.addf %120, %123 : vector<8x64xf32>
    %125 = vector.extract_strided_slice %70 {offsets = [0, 13], sizes = [8, 1], strides = [1, 1]} : vector<8x36xf32> to vector<8x1xf32>
    %126 = vector.broadcast %125 : vector<8x1xf32> to vector<8x64xf32>
    %127 = arith.mulf %126, %58 : vector<8x64xf32>
    %128 = arith.addf %124, %127 : vector<8x64xf32>
    %129 = vector.extract_strided_slice %70 {offsets = [0, 17], sizes = [8, 1], strides = [1, 1]} : vector<8x36xf32> to vector<8x1xf32>
    %130 = vector.broadcast %129 : vector<8x1xf32> to vector<8x64xf32>
    %131 = arith.mulf %130, %59 : vector<8x64xf32>
    %132 = arith.addf %128, %131 : vector<8x64xf32>
    %133 = vector.extract_strided_slice %70 {offsets = [0, 21], sizes = [8, 1], strides = [1, 1]} : vector<8x36xf32> to vector<8x1xf32>
    %134 = vector.broadcast %133 : vector<8x1xf32> to vector<8x64xf32>
    %135 = arith.mulf %134, %62 : vector<8x64xf32>
    %136 = arith.addf %132, %135 : vector<8x64xf32>
    %137 = vector.extract_strided_slice %70 {offsets = [0, 25], sizes = [8, 1], strides = [1, 1]} : vector<8x36xf32> to vector<8x1xf32>
    %138 = vector.broadcast %137 : vector<8x1xf32> to vector<8x64xf32>
    %139 = arith.mulf %138, %65 : vector<8x64xf32>
    %140 = arith.addf %136, %139 : vector<8x64xf32>
    %141 = vector.extract_strided_slice %70 {offsets = [0, 29], sizes = [8, 1], strides = [1, 1]} : vector<8x36xf32> to vector<8x1xf32>
    %142 = vector.broadcast %141 : vector<8x1xf32> to vector<8x64xf32>
    %143 = arith.mulf %142, %66 : vector<8x64xf32>
    %144 = arith.addf %140, %143 : vector<8x64xf32>
    %145 = vector.extract_strided_slice %70 {offsets = [0, 33], sizes = [8, 1], strides = [1, 1]} : vector<8x36xf32> to vector<8x1xf32>
    %146 = vector.broadcast %145 : vector<8x1xf32> to vector<8x64xf32>
    %147 = arith.mulf %146, %69 : vector<8x64xf32>
    %148 = arith.addf %144, %147 : vector<8x64xf32>
    %149 = vector.extract_strided_slice %71 {offsets = [0, 1], sizes = [8, 1], strides = [1, 1]} : vector<8x4xf32> to vector<8x1xf32>
    %150 = vector.broadcast %149 : vector<8x1xf32> to vector<8x64xf32>
    %151 = arith.addf %148, %150 : vector<8x64xf32>
    %cst_41 = arith.constant 0.000000e+00 : f32
    %152 = vector.broadcast %cst_41 : f32 to vector<8x64xf32>
    %153 = vector.extract_strided_slice %70 {offsets = [0, 2], sizes = [8, 1], strides = [1, 1]} : vector<8x36xf32> to vector<8x1xf32>
    %154 = vector.broadcast %153 : vector<8x1xf32> to vector<8x64xf32>
    %155 = arith.mulf %154, %51 : vector<8x64xf32>
    %156 = arith.addf %152, %155 : vector<8x64xf32>
    %157 = vector.extract_strided_slice %70 {offsets = [0, 6], sizes = [8, 1], strides = [1, 1]} : vector<8x36xf32> to vector<8x1xf32>
    %158 = vector.broadcast %157 : vector<8x1xf32> to vector<8x64xf32>
    %159 = arith.mulf %158, %52 : vector<8x64xf32>
    %160 = arith.addf %156, %159 : vector<8x64xf32>
    %161 = vector.extract_strided_slice %70 {offsets = [0, 10], sizes = [8, 1], strides = [1, 1]} : vector<8x36xf32> to vector<8x1xf32>
    %162 = vector.broadcast %161 : vector<8x1xf32> to vector<8x64xf32>
    %163 = arith.mulf %162, %55 : vector<8x64xf32>
    %164 = arith.addf %160, %163 : vector<8x64xf32>
    %165 = vector.extract_strided_slice %70 {offsets = [0, 14], sizes = [8, 1], strides = [1, 1]} : vector<8x36xf32> to vector<8x1xf32>
    %166 = vector.broadcast %165 : vector<8x1xf32> to vector<8x64xf32>
    %167 = arith.mulf %166, %58 : vector<8x64xf32>
    %168 = arith.addf %164, %167 : vector<8x64xf32>
    %169 = vector.extract_strided_slice %70 {offsets = [0, 18], sizes = [8, 1], strides = [1, 1]} : vector<8x36xf32> to vector<8x1xf32>
    %170 = vector.broadcast %169 : vector<8x1xf32> to vector<8x64xf32>
    %171 = arith.mulf %170, %59 : vector<8x64xf32>
    %172 = arith.addf %168, %171 : vector<8x64xf32>
    %173 = vector.extract_strided_slice %70 {offsets = [0, 22], sizes = [8, 1], strides = [1, 1]} : vector<8x36xf32> to vector<8x1xf32>
    %174 = vector.broadcast %173 : vector<8x1xf32> to vector<8x64xf32>
    %175 = arith.mulf %174, %62 : vector<8x64xf32>
    %176 = arith.addf %172, %175 : vector<8x64xf32>
    %177 = vector.extract_strided_slice %70 {offsets = [0, 26], sizes = [8, 1], strides = [1, 1]} : vector<8x36xf32> to vector<8x1xf32>
    %178 = vector.broadcast %177 : vector<8x1xf32> to vector<8x64xf32>
    %179 = arith.mulf %178, %65 : vector<8x64xf32>
    %180 = arith.addf %176, %179 : vector<8x64xf32>
    %181 = vector.extract_strided_slice %70 {offsets = [0, 30], sizes = [8, 1], strides = [1, 1]} : vector<8x36xf32> to vector<8x1xf32>
    %182 = vector.broadcast %181 : vector<8x1xf32> to vector<8x64xf32>
    %183 = arith.mulf %182, %66 : vector<8x64xf32>
    %184 = arith.addf %180, %183 : vector<8x64xf32>
    %185 = vector.extract_strided_slice %70 {offsets = [0, 34], sizes = [8, 1], strides = [1, 1]} : vector<8x36xf32> to vector<8x1xf32>
    %186 = vector.broadcast %185 : vector<8x1xf32> to vector<8x64xf32>
    %187 = arith.mulf %186, %69 : vector<8x64xf32>
    %188 = arith.addf %184, %187 : vector<8x64xf32>
    %189 = vector.extract_strided_slice %71 {offsets = [0, 2], sizes = [8, 1], strides = [1, 1]} : vector<8x4xf32> to vector<8x1xf32>
    %190 = vector.broadcast %189 : vector<8x1xf32> to vector<8x64xf32>
    %191 = arith.addf %188, %190 : vector<8x64xf32>
    %cst_42 = arith.constant 0.000000e+00 : f32
    %192 = vector.broadcast %cst_42 : f32 to vector<8x64xf32>
    %193 = vector.extract_strided_slice %70 {offsets = [0, 3], sizes = [8, 1], strides = [1, 1]} : vector<8x36xf32> to vector<8x1xf32>
    %194 = vector.broadcast %193 : vector<8x1xf32> to vector<8x64xf32>
    %195 = arith.mulf %194, %51 : vector<8x64xf32>
    %196 = arith.addf %192, %195 : vector<8x64xf32>
    %197 = vector.extract_strided_slice %70 {offsets = [0, 7], sizes = [8, 1], strides = [1, 1]} : vector<8x36xf32> to vector<8x1xf32>
    %198 = vector.broadcast %197 : vector<8x1xf32> to vector<8x64xf32>
    %199 = arith.mulf %198, %52 : vector<8x64xf32>
    %200 = arith.addf %196, %199 : vector<8x64xf32>
    %201 = vector.extract_strided_slice %70 {offsets = [0, 11], sizes = [8, 1], strides = [1, 1]} : vector<8x36xf32> to vector<8x1xf32>
    %202 = vector.broadcast %201 : vector<8x1xf32> to vector<8x64xf32>
    %203 = arith.mulf %202, %55 : vector<8x64xf32>
    %204 = arith.addf %200, %203 : vector<8x64xf32>
    %205 = vector.extract_strided_slice %70 {offsets = [0, 15], sizes = [8, 1], strides = [1, 1]} : vector<8x36xf32> to vector<8x1xf32>
    %206 = vector.broadcast %205 : vector<8x1xf32> to vector<8x64xf32>
    %207 = arith.mulf %206, %58 : vector<8x64xf32>
    %208 = arith.addf %204, %207 : vector<8x64xf32>
    %209 = vector.extract_strided_slice %70 {offsets = [0, 19], sizes = [8, 1], strides = [1, 1]} : vector<8x36xf32> to vector<8x1xf32>
    %210 = vector.broadcast %209 : vector<8x1xf32> to vector<8x64xf32>
    %211 = arith.mulf %210, %59 : vector<8x64xf32>
    %212 = arith.addf %208, %211 : vector<8x64xf32>
    %213 = vector.extract_strided_slice %70 {offsets = [0, 23], sizes = [8, 1], strides = [1, 1]} : vector<8x36xf32> to vector<8x1xf32>
    %214 = vector.broadcast %213 : vector<8x1xf32> to vector<8x64xf32>
    %215 = arith.mulf %214, %62 : vector<8x64xf32>
    %216 = arith.addf %212, %215 : vector<8x64xf32>
    %217 = vector.extract_strided_slice %70 {offsets = [0, 27], sizes = [8, 1], strides = [1, 1]} : vector<8x36xf32> to vector<8x1xf32>
    %218 = vector.broadcast %217 : vector<8x1xf32> to vector<8x64xf32>
    %219 = arith.mulf %218, %65 : vector<8x64xf32>
    %220 = arith.addf %216, %219 : vector<8x64xf32>
    %221 = vector.extract_strided_slice %70 {offsets = [0, 31], sizes = [8, 1], strides = [1, 1]} : vector<8x36xf32> to vector<8x1xf32>
    %222 = vector.broadcast %221 : vector<8x1xf32> to vector<8x64xf32>
    %223 = arith.mulf %222, %66 : vector<8x64xf32>
    %224 = arith.addf %220, %223 : vector<8x64xf32>
    %225 = vector.extract_strided_slice %70 {offsets = [0, 35], sizes = [8, 1], strides = [1, 1]} : vector<8x36xf32> to vector<8x1xf32>
    %226 = vector.broadcast %225 : vector<8x1xf32> to vector<8x64xf32>
    %227 = arith.mulf %226, %69 : vector<8x64xf32>
    %228 = arith.addf %224, %227 : vector<8x64xf32>
    %229 = vector.extract_strided_slice %71 {offsets = [0, 3], sizes = [8, 1], strides = [1, 1]} : vector<8x4xf32> to vector<8x1xf32>
    %230 = vector.broadcast %229 : vector<8x1xf32> to vector<8x64xf32>
    %231 = arith.addf %228, %230 : vector<8x64xf32>
    %232 = tpu.concatenate %111, %151, %191, %231 in 1 : vector<8x64xf32>, vector<8x64xf32>, vector<8x64xf32>, vector<8x64xf32> -> vector<8x256xf32>
    %233 = arith.addf %232, %1 : vector<8x256xf32>
    %c0_43 = arith.constant 0 : index
    %c0_44 = arith.constant 0 : index
    %234 = vector.load %arg6[%c0_43, %c0_44] : memref<1x256xf32, #tpu.memory_space<vmem>>, vector<1x256xf32>
    %c0_45 = arith.constant 0 : index
    %c0_46 = arith.constant 0 : index
    %235 = vector.load %arg7[%c0_45, %c0_46] : memref<1x256xf32, #tpu.memory_space<vmem>>, vector<1x256xf32>
    %cst_47 = arith.constant dense<0.000000e+00> : vector<8xf32>
    %236 = vector.multi_reduction <add>, %233, %cst_47 [1] : vector<8x256xf32> to vector<8xf32>
    %237 = vector.shape_cast %236 : vector<8xf32> to vector<8x1xf32>
    %cst_48 = arith.constant 2.560000e+02 : f32
    %238 = vector.broadcast %cst_48 : f32 to vector<8x1xf32>
    %239 = arith.divf %237, %238 : vector<8x1xf32>
    %240 = vector.broadcast %239 : vector<8x1xf32> to vector<8x256xf32>
    %241 = arith.subf %233, %240 : vector<8x256xf32>
    %242 = arith.mulf %241, %241 : vector<8x256xf32>
    %cst_49 = arith.constant dense<0.000000e+00> : vector<8xf32>
    %243 = vector.multi_reduction <add>, %242, %cst_49 [1] : vector<8x256xf32> to vector<8xf32>
    %244 = vector.shape_cast %243 : vector<8xf32> to vector<8x1xf32>
    %cst_50 = arith.constant 2.560000e+02 : f32
    %245 = vector.broadcast %cst_50 : f32 to vector<8x1xf32>
    %246 = arith.divf %244, %245 : vector<8x1xf32>
    %cst_51 = arith.constant 9.99999974E-6 : f32
    %247 = vector.broadcast %cst_51 : f32 to vector<8x1xf32>
    %248 = arith.addf %246, %247 : vector<8x1xf32>
    %249 = math.rsqrt %248 : vector<8x1xf32>
    %250 = vector.broadcast %249 : vector<8x1xf32> to vector<8x256xf32>
    %251 = arith.mulf %241, %250 : vector<8x256xf32>
    %252 = vector.broadcast %234 : vector<1x256xf32> to vector<8x256xf32>
    %253 = arith.mulf %251, %252 : vector<8x256xf32>
    %254 = vector.broadcast %235 : vector<1x256xf32> to vector<8x256xf32>
    %255 = arith.addf %253, %254 : vector<8x256xf32>
    %cst_52 = arith.constant 0.000000e+00 : f32
    %256 = vector.broadcast %cst_52 : f32 to vector<8x384xf32>
    %c0_53 = arith.constant 0 : index
    %c0_54 = arith.constant 0 : index
    %257 = vector.load %arg14[%c0_53, %c0_54] : memref<8x384xf32, #tpu.memory_space<vmem>>, vector<8x384xf32>
    tpu.vector_store %arg14[%c0_53, %c0_54], %256 {strides = array<i32>} : memref<8x384xf32, #tpu.memory_space<vmem>>, vector<8x384xf32>,
    %c0_55 = arith.constant 0 : index
    %c24_56 = arith.constant 24 : index
    %258 = vector.load %arg14[%c0_55, %c24_56] : memref<8x384xf32, #tpu.memory_space<vmem>>, vector<8x256xf32>
    tpu.vector_store %arg14[%c0_55, %c24_56], %255 {strides = array<i32>} : memref<8x384xf32, #tpu.memory_space<vmem>>, vector<8x256xf32>,
    %259 = tpu.iota {dimensions = array<i32: 1>} : vector<8x256xi32>
    %c16_i32 = arith.constant 16 : i32
    %c0_i32_57 = arith.constant 0 : i32
    %260 = arith.cmpi eq, %c16_i32, %c0_i32_57 : i32
    %c1_i32_58 = arith.constant 1 : i32
    %261 = arith.select %260, %c1_i32_58, %c16_i32 : i32
    %262 = vector.broadcast %261 : i32 to vector<8x256xi32>
    %263 = arith.remsi %259, %262 : vector<8x256xi32>
    %c0_i32_59 = arith.constant 0 : i32
    %264 = vector.broadcast %c0_i32_59 : i32 to vector<8x256xi32>
    %265 = arith.cmpi ne, %263, %264 : vector<8x256xi32>
    %c0_i32_60 = arith.constant 0 : i32
    %266 = vector.broadcast %c0_i32_60 : i32 to vector<8x256xi32>
    %267 = arith.cmpi slt, %263, %266 : vector<8x256xi32>
    %c0_i32_61 = arith.constant 0 : i32
    %268 = arith.cmpi slt, %261, %c0_i32_61 : i32
    %269 = vector.broadcast %268 : i1 to vector<8x256xi1>
    %270 = vector.broadcast %269 : vector<8x256xi1> to vector<8x256xi1>
    %271 = arith.xori %267, %270 : vector<8x256xi1>
    %272 = arith.andi %271, %265 : vector<8x256xi1>
    %273 = vector.broadcast %261 : i32 to vector<8x256xi32>
    %274 = arith.addi %263, %273 : vector<8x256xi32>
    %275 = arith.select %272, %274, %263 : vector<8x256xi1>, vector<8x256xi32>
    %c1_i32_62 = arith.constant 1 : i32
    %276 = vector.broadcast %c1_i32_62 : i32 to vector<8x256xi32>
    %277 = arith.cmpi sge, %275, %276 : vector<8x256xi32>
    %c14_i32 = arith.constant 14 : i32
    %278 = vector.broadcast %c14_i32 : i32 to vector<8x256xi32>
    %279 = arith.cmpi sle, %275, %278 : vector<8x256xi32>
    %c0_63 = arith.constant 0 : index
    %c7_64 = arith.constant 7 : index
    %280 = vector.load %arg14[%c0_63, %c7_64] : memref<8x384xf32, #tpu.memory_space<vmem>>, vector<8x256xf32>
    %cst_65 = arith.constant 0.000000e+00 : f32
    %281 = vector.broadcast %cst_65 : f32 to vector<8x256xf32>
    %282 = arith.select %277, %280, %281 : vector<8x256xi1>, vector<8x256xf32>
    %c0_66 = arith.constant 0 : index
    %c8_67 = arith.constant 8 : index
    %283 = vector.load %arg14[%c0_66, %c8_67] : memref<8x384xf32, #tpu.memory_space<vmem>>, vector<8x256xf32>
    %c0_68 = arith.constant 0 : index
    %c9_69 = arith.constant 9 : index
    %284 = vector.load %arg14[%c0_68, %c9_69] : memref<8x384xf32, #tpu.memory_space<vmem>>, vector<8x256xf32>
    %cst_70 = arith.constant 0.000000e+00 : f32
    %285 = vector.broadcast %cst_70 : f32 to vector<8x256xf32>
    %286 = arith.select %279, %284, %285 : vector<8x256xi1>, vector<8x256xf32>
    %c0_71 = arith.constant 0 : index
    %c23_72 = arith.constant 23 : index
    %287 = vector.load %arg14[%c0_71, %c23_72] : memref<8x384xf32, #tpu.memory_space<vmem>>, vector<8x256xf32>
    %cst_73 = arith.constant 0.000000e+00 : f32
    %288 = vector.broadcast %cst_73 : f32 to vector<8x256xf32>
    %289 = arith.select %277, %287, %288 : vector<8x256xi1>, vector<8x256xf32>
    %c0_74 = arith.constant 0 : index
    %c24_75 = arith.constant 24 : index
    %290 = vector.load %arg14[%c0_74, %c24_75] : memref<8x384xf32, #tpu.memory_space<vmem>>, vector<8x256xf32>
    %c0_76 = arith.constant 0 : index
    %c25_77 = arith.constant 25 : index
    %291 = vector.load %arg14[%c0_76, %c25_77] : memref<8x384xf32, #tpu.memory_space<vmem>>, vector<8x256xf32>
    %cst_78 = arith.constant 0.000000e+00 : f32
    %292 = vector.broadcast %cst_78 : f32 to vector<8x256xf32>
    %293 = arith.select %279, %291, %292 : vector<8x256xi1>, vector<8x256xf32>
    %c0_79 = arith.constant 0 : index
    %c39 = arith.constant 39 : index
    %294 = vector.load %arg14[%c0_79, %c39] : memref<8x384xf32, #tpu.memory_space<vmem>>, vector<8x256xf32>
    %cst_80 = arith.constant 0.000000e+00 : f32
    %295 = vector.broadcast %cst_80 : f32 to vector<8x256xf32>
    %296 = arith.select %277, %294, %295 : vector<8x256xi1>, vector<8x256xf32>
    %c0_81 = arith.constant 0 : index
    %c40 = arith.constant 40 : index
    %297 = vector.load %arg14[%c0_81, %c40] : memref<8x384xf32, #tpu.memory_space<vmem>>, vector<8x256xf32>
    %c0_82 = arith.constant 0 : index
    %c41 = arith.constant 41 : index
    %298 = vector.load %arg14[%c0_82, %c41] : memref<8x384xf32, #tpu.memory_space<vmem>>, vector<8x256xf32>
    %cst_83 = arith.constant 0.000000e+00 : f32
    %299 = vector.broadcast %cst_83 : f32 to vector<8x256xf32>
    %300 = arith.select %279, %298, %299 : vector<8x256xi1>, vector<8x256xf32>
    %301 = tpu.concatenate %282, %283, %286, %289, %290, %293, %296, %297, %300 in 0 : vector<8x256xf32>, vector<8x256xf32>, vector<8x256xf32>, vector<8x256xf32>, vector<8x256xf32>, vector<8x256xf32>, vector<8x256xf32>, vector<8x256xf32>, vector<8x256xf32> -> vector<72x256xf32>
    %302 = arith.truncf %301 : vector<72x256xf32> to vector<72x256xbf16>
    %c0_84 = arith.constant 0 : index
    %c0_85 = arith.constant 0 : index
    %303 = vector.load %arg8[%c0_84, %c0_85] : memref<8x72xbf16, #tpu.memory_space<vmem>>, vector<8x72xbf16>
    %cst_86 = arith.constant dense<0.000000e+00> : vector<8x256xf32>
    %304 = tpu.matmul %303, %302, %cst_86 {dimension_numbers = #tpu.dot_dimension_numbers<[1], [0], [0], [1], [0, 0, 1, 1], [], []>} : vector<8x72xbf16>, vector<72x256xbf16>, vector<8x256xf32> -> vector<8x256xf32>
    %c0_87 = arith.constant 0 : index
    %c0_88 = arith.constant 0 : index
    %305 = vector.load %arg9[%c0_87, %c0_88] : memref<8x1xf32, #tpu.memory_space<vmem>>, vector<8x1xf32>
    %306 = vector.broadcast %305 : vector<8x1xf32> to vector<8x256xf32>
    %307 = arith.addf %304, %306 : vector<8x256xf32>
    %308 = arith.addf %255, %307 : vector<8x256xf32>
    %c0_89 = arith.constant 0 : index
    %c0_90 = arith.constant 0 : index
    %309 = vector.load %arg10[%c0_89, %c0_90] : memref<1x256xf32, #tpu.memory_space<vmem>>, vector<1x256xf32>
    %c0_91 = arith.constant 0 : index
    %c0_92 = arith.constant 0 : index
    %310 = vector.load %arg11[%c0_91, %c0_92] : memref<1x256xf32, #tpu.memory_space<vmem>>, vector<1x256xf32>
    %cst_93 = arith.constant dense<0.000000e+00> : vector<8xf32>
    %311 = vector.multi_reduction <add>, %308, %cst_93 [1] : vector<8x256xf32> to vector<8xf32>
    %312 = vector.shape_cast %311 : vector<8xf32> to vector<8x1xf32>
    %cst_94 = arith.constant 2.560000e+02 : f32
    %313 = vector.broadcast %cst_94 : f32 to vector<8x1xf32>
    %314 = arith.divf %312, %313 : vector<8x1xf32>
    %315 = vector.broadcast %314 : vector<8x1xf32> to vector<8x256xf32>
    %316 = arith.subf %308, %315 : vector<8x256xf32>
    %317 = arith.mulf %316, %316 : vector<8x256xf32>
    %cst_95 = arith.constant dense<0.000000e+00> : vector<8xf32>
    %318 = vector.multi_reduction <add>, %317, %cst_95 [1] : vector<8x256xf32> to vector<8xf32>
    %319 = vector.shape_cast %318 : vector<8xf32> to vector<8x1xf32>
    %cst_96 = arith.constant 2.560000e+02 : f32
    %320 = vector.broadcast %cst_96 : f32 to vector<8x1xf32>
    %321 = arith.divf %319, %320 : vector<8x1xf32>
    %cst_97 = arith.constant 9.99999974E-6 : f32
    %322 = vector.broadcast %cst_97 : f32 to vector<8x1xf32>
    %323 = arith.addf %321, %322 : vector<8x1xf32>
    %324 = math.rsqrt %323 : vector<8x1xf32>
    %325 = vector.broadcast %324 : vector<8x1xf32> to vector<8x256xf32>
    %326 = arith.mulf %316, %325 : vector<8x256xf32>
    %327 = vector.broadcast %309 : vector<1x256xf32> to vector<8x256xf32>
    %328 = arith.mulf %326, %327 : vector<8x256xf32>
    %329 = vector.broadcast %310 : vector<1x256xf32> to vector<8x256xf32>
    %330 = arith.addf %328, %329 : vector<8x256xf32>
    %c0_98 = arith.constant 0 : index
    %c0_99 = arith.constant 0 : index
    %c0_100 = arith.constant 0 : index
    %331 = vector.load %arg12[%c0_98, %c0_99, %c0_100] : memref<1x8x256xf32, #tpu.memory_space<vmem>>, vector<1x8x256xf32>
    %332 = vector.shape_cast %331 : vector<1x8x256xf32> to vector<8x256xf32>
    %333 = vector.shape_cast %330 : vector<8x256xf32> to vector<1x8x256xf32>
    tpu.vector_store %arg12[%c0_98, %c0_99, %c0_100], %333 {strides = array<i32>} : memref<1x8x256xf32, #tpu.memory_space<vmem>>, vector<1x8x256xf32>,
    return
  }
  func.func @transform_0(%arg0: i32) -> (i32, i32, i32) {
    %c0_i32 = arith.constant 0 : i32
    %c0_i32_0 = arith.constant 0 : i32
    %c0_i32_1 = arith.constant 0 : i32
    return %arg0, %c0_i32, %c0_i32_0 : i32, i32, i32
  }
  func.func @transform_1(%arg0: i32) -> (i32, i32) {
    %c0_i32 = arith.constant 0 : i32
    %c0_i32_0 = arith.constant 0 : i32
    %c0_i32_1 = arith.constant 0 : i32
    return %c0_i32, %c0_i32_0 : i32, i32
  }
  func.func @transform_2(%arg0: i32) -> (i32, i32) {
    %c0_i32 = arith.constant 0 : i32
    %c0_i32_0 = arith.constant 0 : i32
    %c0_i32_1 = arith.constant 0 : i32
    return %c0_i32, %c0_i32_0 : i32, i32
  }
  func.func @transform_3(%arg0: i32) -> (i32, i32) {
    %c0_i32 = arith.constant 0 : i32
    %c0_i32_0 = arith.constant 0 : i32
    %c0_i32_1 = arith.constant 0 : i32
    return %c0_i32, %c0_i32_0 : i32, i32
  }
  func.func @transform_4(%arg0: i32) -> (i32, i32) {
    %c0_i32 = arith.constant 0 : i32
    %c0_i32_0 = arith.constant 0 : i32
    %c0_i32_1 = arith.constant 0 : i32
    return %c0_i32, %c0_i32_0 : i32, i32
  }
  func.func @transform_5(%arg0: i32) -> (i32, i32) {
    %c0_i32 = arith.constant 0 : i32
    %c0_i32_0 = arith.constant 0 : i32
    %c0_i32_1 = arith.constant 0 : i32
    return %c0_i32, %c0_i32_0 : i32, i32
  }
  func.func @transform_6(%arg0: i32) -> (i32, i32) {
    %c0_i32 = arith.constant 0 : i32
    %c0_i32_0 = arith.constant 0 : i32
    %c0_i32_1 = arith.constant 0 : i32
    return %c0_i32, %c0_i32_0 : i32, i32
  }
  func.func @transform_7(%arg0: i32) -> (i32, i32) {
    %c0_i32 = arith.constant 0 : i32
    %c0_i32_0 = arith.constant 0 : i32
    %c0_i32_1 = arith.constant 0 : i32
    return %c0_i32, %c0_i32_0 : i32, i32
  }
  func.func @transform_8(%arg0: i32) -> (i32, i32) {
    %c0_i32 = arith.constant 0 : i32
    %c0_i32_0 = arith.constant 0 : i32
    %c0_i32_1 = arith.constant 0 : i32
    return %c0_i32, %c0_i32_0 : i32, i32
  }
  func.func @transform_9(%arg0: i32) -> (i32, i32) {
    %c0_i32 = arith.constant 0 : i32
    %c0_i32_0 = arith.constant 0 : i32
    %c0_i32_1 = arith.constant 0 : i32
    return %c0_i32, %c0_i32_0 : i32, i32
  }
  func.func @transform_10(%arg0: i32) -> (i32, i32) {
    %c0_i32 = arith.constant 0 : i32
    %c0_i32_0 = arith.constant 0 : i32
    %c0_i32_1 = arith.constant 0 : i32
    return %c0_i32, %c0_i32_0 : i32, i32
  }
  func.func @transform_11(%arg0: i32) -> (i32, i32, i32) {
    %c0_i32 = arith.constant 0 : i32
    %c0_i32_0 = arith.constant 0 : i32
    %c0_i32_1 = arith.constant 0 : i32
    return %arg0, %c0_i32, %c0_i32_0 : i32, i32, i32
  }
}

</mosaic_0001>

<llo_original>
// kernel: tpu_custom_call.1
$region0: #{tpu_custom_call.1}
  #allocation0 [shape = 'u32[]', space=smem, size = 0x4, offset = 0x4, fixed_abs, tag = 'smem constant byte address 0x4 - core index']
  #allocation1 [shape = 'u32[72,128]{1,0:T(1,128)}', space=vmem, size = 0x9000, scoped, tag = 'internal scratch']
  #allocation2 [shape = 'f32[8,128]{1,0:T(8,128)}', space=vmem, size = 0x1000, scoped, tag = 'scratch operand']
  #allocation3 [shape = 'f32[8,384]{1,0:T(8,128)}', space=vmem, size = 0x3000, scoped, tag = 'scratch operand']
  %s0 = inlined_call_operand.vmem [shape: f32[2,8,256], index: 0, kind: input, shape index: {}]
  %s1 = inlined_call_operand.vmem [shape: bf16[256,192], index: 1, kind: input, shape index: {}]
  %s2 = inlined_call_operand.vmem [shape: f32[1,192], index: 2, kind: input, shape index: {}]
  %s3 = inlined_call_operand.vmem [shape: f32[8,36], index: 3, kind: input, shape index: {}]
  %s4 = inlined_call_operand.vmem [shape: f32[8,4], index: 4, kind: input, shape index: {}]
  %s5 = inlined_call_operand.vmem [shape: f32[1,256], index: 5, kind: input, shape index: {}]
  %s6 = inlined_call_operand.vmem [shape: f32[1,256], index: 6, kind: input, shape index: {}]
  %s7 = inlined_call_operand.vmem [shape: bf16[8,72], index: 7, kind: input, shape index: {}]
  %s8 = inlined_call_operand.vmem [shape: f32[8,1], index: 8, kind: input, shape index: {}]
  %s9 = inlined_call_operand.vmem [shape: f32[1,256], index: 9, kind: input, shape index: {}]
  %s10 = inlined_call_operand.vmem [shape: f32[1,256], index: 10, kind: input, shape index: {}]
  %s11 = inlined_call_operand.hbm [shape: f32[2,8,256], index: 11, kind: output, shape index: {}]
  %s12 = sld [smem:[#allocation0]]
  $region77: #{tpu_custom_call.1} parent=0
    _
  %s14 = ssub.s32 1, %s12
  %s15 = scalar_select 0, %s14, %s12
  $region1: #{tpu_custom_call.1} parent=0
    #allocation4 [shape = 'u8[16384]{0}', space=vmem, size = 0x4000, scoped, tag = 'output window, operand 0']
    #allocation5 [shape = 's32[2]{0}', space=sflag, size = 0x8, scoped, tag = 'scoped memory for tpu_custom_call.1']
    %16 = vsyncpa [#allocation5], 0
    %s17 = scalar_lea.sflag [#allocation5], 1
    %18 = vsyncpa %s17, 0
    loop: start=0, step=1, limit=4
    $region2: #{tpu_custom_call.1} parent=1 // loop_pre_header
      _
    $region3: #{tpu_custom_call.1} parent=1 // loop_header
      %s20 = sphi 0, %s24
      %p21 = scmp.ge.s32.totalorder %s20, 4
      %s30 = sphi 0, %s32
      %s33 = sphi 0, %s30
      %s34 = sphi 0, %s33
      %s50 = sphi 0, %s34
      %s54 = sphi 0, %s54
      %s56 = sphi 0, %s54
      %s57 = sphi 0, %s56
      %s71 = sphi 0, %s57
      %s75 = sphi 0, %s75
      %s77 = sphi 0, %s75
      %s78 = sphi 0, %s77
      %s92 = sphi 0, %s78
      %s96 = sphi 0, %s96
      %s98 = sphi 0, %s96
      %s99 = sphi 0, %s98
      %s113 = sphi 0, %s99
      %s117 = sphi 0, %s117
      %s119 = sphi 0, %s117
      %s120 = sphi 0, %s119
      %s134 = sphi 0, %s120
      %s138 = sphi 0, %s138
      %s140 = sphi 0, %s138
      %s141 = sphi 0, %s140
      %s155 = sphi 0, %s141
      %s159 = sphi 0, %s159
      %s161 = sphi 0, %s159
      %s162 = sphi 0, %s161
      %s176 = sphi 0, %s162
      %s180 = sphi 0, %s180
      %s182 = sphi 0, %s180
      %s183 = sphi 0, %s182
      %s197 = sphi 0, %s183
      %s201 = sphi 0, %s201
      %s203 = sphi 0, %s201
      %s204 = sphi 0, %s203
      %s218 = sphi 0, %s204
      %s222 = sphi 0, %s222
      %s224 = sphi 0, %s222
      %s225 = sphi 0, %s224
      %s239 = sphi 0, %s225
      %s243 = sphi 0, %s243
      %s245 = sphi 0, %s243
      %s246 = sphi 0, %s245
      %s260 = sphi 0, %s246
      %s266 = sphi 0, %s268
      %s269 = sphi 0, %s266
      %s270 = sphi 0, %s269
      %s286 = sphi 0, %s270
    $region4: #{tpu_custom_call.1} parent=1 // loop_header_branch
      %23 = sbr.rel (%p21) target = $region8
    $region5: #{tpu_custom_call.1} parent=1 // loop_body
      %s25 = ssub.s32 %s20, 1
      %s26 = ssub.s32 %s20, 2
      %s27 = sadd.s32 %s20, 1
      %s28 = ssub.s32 %s20, %s27
      %p29 = scmp.eq.s32.totalorder %s28, 0
      %s31 = sadd.s32 %s30, 1
      %s32 = scalar_select %p29, %s30, %s31
      %p35 = pneg %p29
      %p36 = scmp.eq.s32.totalorder %s20, 1
      %p37 = por %p35, %p36
      %p38 = scmp.ne.s32.totalorder %s30, %s33
      %p39 = scmp.eq.s32.totalorder %s20, 0
      %p40 = por %p38, %p39
      %p41 = scmp.ne.s32.totalorder %s30, %s33
      %p42 = scmp.eq.s32.totalorder %s25, 1
      %p43 = por %p41, %p42
      %p44 = scmp.ne.s32.totalorder %s33, %s34
      %p45 = scmp.eq.s32.totalorder %s25, 0
      %p46 = por %p44, %p45
      %p47 = scmp.ne.s32.totalorder %s33, %s34
      %p48 = scmp.eq.s32.totalorder %s26, 1
      %p49 = por %p47, %p48
      %p51 = scmp.ne.s32.totalorder %s34, %s50
      %p52 = scmp.eq.s32.totalorder %s26, 0
      %p53 = por %p51, %p52
      %s55 = sadd.s32 %s54, 1
      %p58 = scmp.eq.s32.totalorder %s20, 1
      %p59 = scmp.ne.s32.totalorder %s54, %s56
      %p60 = scmp.eq.s32.totalorder %s20, 0
      %p61 = por %p59, %p60
      %p62 = scmp.ne.s32.totalorder %s54, %s56
      %p63 = scmp.eq.s32.totalorder %s25, 1
      %p64 = por %p62, %p63
      %p65 = scmp.ne.s32.totalorder %s56, %s57
      %p66 = scmp.eq.s32.totalorder %s25, 0
      %p67 = por %p65, %p66
      %p68 = scmp.ne.s32.totalorder %s56, %s57
      %p69 = scmp.eq.s32.totalorder %s26, 1
      %p70 = por %p68, %p69
      %p72 = scmp.ne.s32.totalorder %s57, %s71
      %p73 = scmp.eq.s32.totalorder %s26, 0
      %p74 = por %p72, %p73
      %s76 = sadd.s32 %s75, 1
      %p79 = scmp.eq.s32.totalorder %s20, 1
      %p80 = scmp.ne.s32.totalorder %s75, %s77
      %p81 = scmp.eq.s32.totalorder %s20, 0
      %p82 = por %p80, %p81
      %p83 = scmp.ne.s32.totalorder %s75, %s77
      %p84 = scmp.eq.s32.totalorder %s25, 1
      %p85 = por %p83, %p84
      %p86 = scmp.ne.s32.totalorder %s77, %s78
      %p87 = scmp.eq.s32.totalorder %s25, 0
      %p88 = por %p86, %p87
      %p89 = scmp.ne.s32.totalorder %s77, %s78
      %p90 = scmp.eq.s32.totalorder %s26, 1
      %p91 = por %p89, %p90
      %p93 = scmp.ne.s32.totalorder %s78, %s92
      %p94 = scmp.eq.s32.totalorder %s26, 0
      %p95 = por %p93, %p94
      %s97 = sadd.s32 %s96, 1
      %p100 = scmp.eq.s32.totalorder %s20, 1
      %p101 = scmp.ne.s32.totalorder %s96, %s98
      %p102 = scmp.eq.s32.totalorder %s20, 0
      %p103 = por %p101, %p102
      %p104 = scmp.ne.s32.totalorder %s96, %s98
      %p105 = scmp.eq.s32.totalorder %s25, 1
      %p106 = por %p104, %p105
      %p107 = scmp.ne.s32.totalorder %s98, %s99
      %p108 = scmp.eq.s32.totalorder %s25, 0
      %p109 = por %p107, %p108
      %p110 = scmp.ne.s32.totalorder %s98, %s99
      %p111 = scmp.eq.s32.totalorder %s26, 1
      %p112 = por %p110, %p111
      %p114 = scmp.ne.s32.totalorder %s99, %s113
      %p115 = scmp.eq.s32.totalorder %s26, 0
      %p116 = por %p114, %p115
      %s118 = sadd.s32 %s117, 1
      %p121 = scmp.eq.s32.totalorder %s20, 1
      %p122 = scmp.ne.s32.totalorder %s117, %s119
      %p123 = scmp.eq.s32.totalorder %s20, 0
      %p124 = por %p122, %p123
      %p125 = scmp.ne.s32.totalorder %s117, %s119
      %p126 = scmp.eq.s32.totalorder %s25, 1
      %p127 = por %p125, %p126
      %p128 = scmp.ne.s32.totalorder %s119, %s120
      %p129 = scmp.eq.s32.totalorder %s25, 0
      %p130 = por %p128, %p129
      %p131 = scmp.ne.s32.totalorder %s119, %s120
      %p132 = scmp.eq.s32.totalorder %s26, 1
      %p133 = por %p131, %p132
      %p135 = scmp.ne.s32.totalorder %s120, %s134
      %p136 = scmp.eq.s32.totalorder %s26, 0
      %p137 = por %p135, %p136
      %s139 = sadd.s32 %s138, 1
      %p142 = scmp.eq.s32.totalorder %s20, 1
      %p143 = scmp.ne.s32.totalorder %s138, %s140
      %p144 = scmp.eq.s32.totalorder %s20, 0
      %p145 = por %p143, %p144
      %p146 = scmp.ne.s32.totalorder %s138, %s140
      %p147 = scmp.eq.s32.totalorder %s25, 1
      %p148 = por %p146, %p147
      %p149 = scmp.ne.s32.totalorder %s140, %s141
      %p150 = scmp.eq.s32.totalorder %s25, 0
      %p151 = por %p149, %p150
      %p152 = scmp.ne.s32.totalorder %s140, %s141
      %p153 = scmp.eq.s32.totalorder %s26, 1
      %p154 = por %p152, %p153
      %p156 = scmp.ne.s32.totalorder %s141, %s155
      %p157 = scmp.eq.s32.totalorder %s26, 0
      %p158 = por %p156, %p157
      %s160 = sadd.s32 %s159, 1
      %p163 = scmp.eq.s32.totalorder %s20, 1
      %p164 = scmp.ne.s32.totalorder %s159, %s161
      %p165 = scmp.eq.s32.totalorder %s20, 0
      %p166 = por %p164, %p165
      %p167 = scmp.ne.s32.totalorder %s159, %s161
      %p168 = scmp.eq.s32.totalorder %s25, 1
      %p169 = por %p167, %p168
      %p170 = scmp.ne.s32.totalorder %s161, %s162
      %p171 = scmp.eq.s32.totalorder %s25, 0
      %p172 = por %p170, %p171
      %p173 = scmp.ne.s32.totalorder %s161, %s162
      %p174 = scmp.eq.s32.totalorder %s26, 1
      %p175 = por %p173, %p174
      %p177 = scmp.ne.s32.totalorder %s162, %s176
      %p178 = scmp.eq.s32.totalorder %s26, 0
      %p179 = por %p177, %p178
      %s181 = sadd.s32 %s180, 1
      %p184 = scmp.eq.s32.totalorder %s20, 1
      %p185 = scmp.ne.s32.totalorder %s180, %s182
      %p186 = scmp.eq.s32.totalorder %s20, 0
      %p187 = por %p185, %p186
      %p188 = scmp.ne.s32.totalorder %s180, %s182
      %p189 = scmp.eq.s32.totalorder %s25, 1
      %p190 = por %p188, %p189
      %p191 = scmp.ne.s32.totalorder %s182, %s183
      %p192 = scmp.eq.s32.totalorder %s25, 0
      %p193 = por %p191, %p192
      %p194 = scmp.ne.s32.totalorder %s182, %s183
      %p195 = scmp.eq.s32.totalorder %s26, 1
      %p196 = por %p194, %p195
      %p198 = scmp.ne.s32.totalorder %s183, %s197
      %p199 = scmp.eq.s32.totalorder %s26, 0
      %p200 = por %p198, %p199
      %s202 = sadd.s32 %s201, 1
      %p205 = scmp.eq.s32.totalorder %s20, 1
      %p206 = scmp.ne.s32.totalorder %s201, %s203
      %p207 = scmp.eq.s32.totalorder %s20, 0
      %p208 = por %p206, %p207
      %p209 = scmp.ne.s32.totalorder %s201, %s203
      %p210 = scmp.eq.s32.totalorder %s25, 1
      %p211 = por %p209, %p210
      %p212 = scmp.ne.s32.totalorder %s203, %s204
      %p213 = scmp.eq.s32.totalorder %s25, 0
      %p214 = por %p212, %p213
      %p215 = scmp.ne.s32.totalorder %s203, %s204
      %p216 = scmp.eq.s32.totalorder %s26, 1
      %p217 = por %p215, %p216
      %p219 = scmp.ne.s32.totalorder %s204, %s218
      %p220 = scmp.eq.s32.totalorder %s26, 0
      %p221 = por %p219, %p220
      %s223 = sadd.s32 %s222, 1
      %p226 = scmp.eq.s32.totalorder %s20, 1
      %p227 = scmp.ne.s32.totalorder %s222, %s224
      %p228 = scmp.eq.s32.totalorder %s20, 0
      %p229 = por %p227, %p228
      %p230 = scmp.ne.s32.totalorder %s222, %s224
      %p231 = scmp.eq.s32.totalorder %s25, 1
      %p232 = por %p230, %p231
      %p233 = scmp.ne.s32.totalorder %s224, %s225
      %p234 = scmp.eq.s32.totalorder %s25, 0
      %p235 = por %p233, %p234
      %p236 = scmp.ne.s32.totalorder %s224, %s225
      %p237 = scmp.eq.s32.totalorder %s26, 1
      %p238 = por %p236, %p237
      %p240 = scmp.ne.s32.totalorder %s225, %s239
      %p241 = scmp.eq.s32.totalorder %s26, 0
      %p242 = por %p240, %p241
      %s244 = sadd.s32 %s243, 1
      %p247 = scmp.eq.s32.totalorder %s20, 1
      %p248 = scmp.ne.s32.totalorder %s243, %s245
      %p249 = scmp.eq.s32.totalorder %s20, 0
      %p250 = por %p248, %p249
      %p251 = scmp.ne.s32.totalorder %s243, %s245
      %p252 = scmp.eq.s32.totalorder %s25, 1
      %p253 = por %p251, %p252
      %p254 = scmp.ne.s32.totalorder %s245, %s246
      %p255 = scmp.eq.s32.totalorder %s25, 0
      %p256 = por %p254, %p255
      %p257 = scmp.ne.s32.totalorder %s245, %s246
      %p258 = scmp.eq.s32.totalorder %s26, 1
      %p259 = por %p257, %p258
      %p261 = scmp.ne.s32.totalorder %s246, %s260
      %p262 = scmp.eq.s32.totalorder %s26, 0
      %p263 = por %p261, %p262
      %s264 = ssub.s32 %s20, %s27
      %p265 = scmp.eq.s32.totalorder %s264, 0
      %s267 = sadd.s32 %s266, 1
      %s268 = scalar_select %p265, %s266, %s267
      %p271 = pneg %p265
      %p272 = scmp.eq.s32.totalorder %s20, 1
      %p273 = por %p271, %p272
      %p274 = scmp.ne.s32.totalorder %s266, %s269
      %p275 = scmp.eq.s32.totalorder %s20, 0
      %p276 = por %p274, %p275
      %p277 = scmp.ne.s32.totalorder %s266, %s269
      %p278 = scmp.eq.s32.totalorder %s25, 1
      %p279 = por %p277, %p278
      %p280 = scmp.ne.s32.totalorder %s269, %s270
      %p281 = scmp.eq.s32.totalorder %s25, 0
      %p282 = por %p280, %p281
      %p283 = scmp.ne.s32.totalorder %s269, %s270
      %p284 = scmp.eq.s32.totalorder %s26, 1
      %p285 = por %p283, %p284
      %p287 = scmp.ne.s32.totalorder %s270, %s286
      %p288 = scmp.eq.s32.totalorder %s26, 0
      %p289 = por %p287, %p288
      %p290 = scmp.le.s32.totalorder 1, %s20
      %p291 = scmp.lt.s32.totalorder %s20, 3
      %p292 = pnand %p290, %p291
      %p293 = pneg %p292
      // Predicated region
      $region9: #{tpu_custom_call.1} parent=5 // pred_check
        _
      $region10: #{tpu_custom_call.1} parent=5 // pred_check_branch
        %295 = sbr.rel (%p292) target = $region12
      $region11: #{tpu_custom_call.1} parent=5 // pred_region
        %s296 = ssub.s32 %s20, 1
        // Predicated region
        $region13: #{tpu_custom_call.1} parent=11 // pred_check
          %p297 = pneg %p67
        $region14: #{tpu_custom_call.1} parent=11 // pred_check_branch
          %299 = sbr.rel (%p297) target = $region16
        $region15: #{tpu_custom_call.1} parent=11 // pred_region
          _
        $region16: #{tpu_custom_call.1} parent=11 // pred_fallthru
          _
        // Predicated region
        $region17: #{tpu_custom_call.1} parent=11 // pred_check
          %p300 = pneg %p88
        $region18: #{tpu_custom_call.1} parent=11 // pred_check_branch
          %302 = sbr.rel (%p300) target = $region20
        $region19: #{tpu_custom_call.1} parent=11 // pred_region
          _
        $region20: #{tpu_custom_call.1} parent=11 // pred_fallthru
          _
        // Predicated region
        $region21: #{tpu_custom_call.1} parent=11 // pred_check
          %p303 = pneg %p109
        $region22: #{tpu_custom_call.1} parent=11 // pred_check_branch
          %305 = sbr.rel (%p303) target = $region24
        $region23: #{tpu_custom_call.1} parent=11 // pred_region
          _
        $region24: #{tpu_custom_call.1} parent=11 // pred_fallthru
          _
        // Predicated region
        $region25: #{tpu_custom_call.1} parent=11 // pred_check
          %p306 = pneg %p130
        $region26: #{tpu_custom_call.1} parent=11 // pred_check_branch
          %308 = sbr.rel (%p306) target = $region28
        $region27: #{tpu_custom_call.1} parent=11 // pred_region
          _
        $region28: #{tpu_custom_call.1} parent=11 // pred_fallthru
          _
        // Predicated region
        $region29: #{tpu_custom_call.1} parent=11 // pred_check
          %p309 = pneg %p151
        $region30: #{tpu_custom_call.1} parent=11 // pred_check_branch
          %311 = sbr.rel (%p309) target = $region32
        $region31: #{tpu_custom_call.1} parent=11 // pred_region
          _
        $region32: #{tpu_custom_call.1} parent=11 // pred_fallthru
          _
        // Predicated region
        $region33: #{tpu_custom_call.1} parent=11 // pred_check
          %p312 = pneg %p172
        $region34: #{tpu_custom_call.1} parent=11 // pred_check_branch
          %314 = sbr.rel (%p312) target = $region36
        $region35: #{tpu_custom_call.1} parent=11 // pred_region
          _
        $region36: #{tpu_custom_call.1} parent=11 // pred_fallthru
          _
        // Predicated region
        $region37: #{tpu_custom_call.1} parent=11 // pred_check
          %p315 = pneg %p193
        $region38: #{tpu_custom_call.1} parent=11 // pred_check_branch
          %317 = sbr.rel (%p315) target = $region40
        $region39: #{tpu_custom_call.1} parent=11 // pred_region
          _
        $region40: #{tpu_custom_call.1} parent=11 // pred_fallthru
          _
        // Predicated region
        $region41: #{tpu_custom_call.1} parent=11 // pred_check
          %p318 = pneg %p214
        $region42: #{tpu_custom_call.1} parent=11 // pred_check_branch
          %320 = sbr.rel (%p318) target = $region44
        $region43: #{tpu_custom_call.1} parent=11 // pred_region
          _
        $region44: #{tpu_custom_call.1} parent=11 // pred_fallthru
          _
        // Predicated region
        $region45: #{tpu_custom_call.1} parent=11 // pred_check
          %p321 = pneg %p235
        $region46: #{tpu_custom_call.1} parent=11 // pred_check_branch
          %323 = sbr.rel (%p321) target = $region48
        $region47: #{tpu_custom_call.1} parent=11 // pred_region
          _
        $region48: #{tpu_custom_call.1} parent=11 // pred_fallthru
          _
        // Predicated region
        $region49: #{tpu_custom_call.1} parent=11 // pred_check
          %p324 = pneg %p256
        $region50: #{tpu_custom_call.1} parent=11 // pred_check_branch
          %326 = sbr.rel (%p324) target = $region52
        $region51: #{tpu_custom_call.1} parent=11 // pred_region
          _
        $region52: #{tpu_custom_call.1} parent=11 // pred_fallthru
          _
      $region12: #{tpu_custom_call.1} parent=5 // pred_fallthru
        _
      %p327 = scmp.lt.s32.totalorder %s20, 2
      // Predicated region
      $region53: #{tpu_custom_call.1} parent=5 // pred_check
        %p328 = pneg %p327
      $region54: #{tpu_custom_call.1} parent=5 // pred_check_branch
        %330 = sbr.rel (%p328) target = $region56
      $region55: #{tpu_custom_call.1} parent=5 // pred_region
        // Predicated region
        $region57: #{tpu_custom_call.1} parent=55 // pred_check
          %p331 = pneg %p40
        $region58: #{tpu_custom_call.1} parent=55 // pred_check_branch
          %333 = sbr.rel (%p331) target = $region60
        $region59: #{tpu_custom_call.1} parent=55 // pred_region
          %p334 = scmp.lt.s32.totalorder %s20, 1
          %s335 = scalar_select %p334, %s20, 1
          %s336 = smul.addr %s335, 2
          %s337 = smul.addr %s336, 8
          %s338 = scalar_lea.vmem %s0, %s337
        $region60: #{tpu_custom_call.1} parent=55 // pred_fallthru
          _
      $region56: #{tpu_custom_call.1} parent=5 // pred_fallthru
        _
      %p339 = scmp.le.s32.totalorder 1, %s20
      %p340 = scmp.lt.s32.totalorder %s20, 3
      %p341 = pnand %p339, %p340
      %p342 = pneg %p341
      // Predicated region
      $region61: #{tpu_custom_call.1} parent=5 // pred_check
        _
      $region62: #{tpu_custom_call.1} parent=5 // pred_check_branch
        %344 = sbr.rel (%p341) target = $region64
      $region63: #{tpu_custom_call.1} parent=5 // pred_region
        %s345 = ssub.s32 %s20, 1
        %p346 = scmp.lt.s32.totalorder %s25, 1
        %s347 = scalar_select %p346, %s25, 1
        %s348 = smul.addr %s347, 2
        %s349 = smul.addr %s348, 8
        %s350 = scalar_lea.vmem %s0, %s349
        %p351 = pneg %p46
        %p352 = pneg %p43
        %p353 = pneg %p67
        %p354 = pneg %p64
        %p355 = pneg %p88
        %p356 = pneg %p85
        %p357 = pneg %p109
        %p358 = pneg %p106
        %p359 = pneg %p130
        %p360 = pneg %p127
        %p361 = pneg %p151
        %p362 = pneg %p148
        %p363 = pneg %p172
        %p364 = pneg %p169
        %p365 = pneg %p193
        %p366 = pneg %p190
        %p367 = pneg %p214
        %p368 = pneg %p211
        %p369 = pneg %p235
        %p370 = pneg %p232
        %p371 = pneg %p256
        %p372 = pneg %p253
        %p373 = pneg %p282
        %p374 = pneg %p279
        %s375 = sand.u32 %s269, 1
        %s376 = scalar_lea.sflag [#allocation5], %s375
        %s377 = sand.u32 %s269, 1
        %s378 = smul.addr %s377, 16
        %s379 = scalar_lea.vmem [#allocation4], %s378
        %p380 = scmp.lt.s32.totalorder %s25, 1
        %s381 = scalar_select %p380, %s25, 1
        %s382 = smul.addr %s381, 2
        %s383 = smul.addr %s382, 8
        %s384 = scalar_lea.vmem %s0, %s383
        %v386 = vld [vmem:[%s384] sm:$0xff]
        %v387 = vld [vmem:[%s384 + $0x8] sm:$0xff]
        %v388 = vpack.c.bf16 %v386, %v386
        %v389 = vpack.c.bf16 %v387, %v387
        %v390 = vld [vmem:[%s1] sm:$0xff]
        %v391 = vld [vmem:[%s1 + $0x8] sm:$0xff]
        %v392 = vld [vmem:[%s1 + $0x10] sm:$0xff]
        %v393 = vld [vmem:[%s1 + $0x18] sm:$0xff]
        %v394 = vld [vmem:[%s1 + $0x20] sm:$0xff]
        %v395 = vld [vmem:[%s1 + $0x28] sm:$0xff]
        %v396 = vld [vmem:[%s1 + $0x30] sm:$0xff]
        %v397 = vld [vmem:[%s1 + $0x38] sm:$0xff]
        %v398 = vld [vmem:[%s1 + $0x40] sm:$0xff]
        %v399 = vld [vmem:[%s1 + $0x48] sm:$0xff]
        %v400 = vld [vmem:[%s1 + $0x50] sm:$0xff]
        %v401 = vld [vmem:[%s1 + $0x58] sm:$0xff]
        %v402 = vld [vmem:[%s1 + $0x60] sm:$0xff]
        %v403 = vld [vmem:[%s1 + $0x68] sm:$0xff]
        %v404 = vld [vmem:[%s1 + $0x70] sm:$0xff]
        %v405 = vld [vmem:[%s1 + $0x78] sm:$0xff]
        %v406 = vld [vmem:[%s1 + $0x80] sm:$0xff]
        %v407 = vld [vmem:[%s1 + $0x88] sm:$0xff]
        %v408 = vld [vmem:[%s1 + $0x90] sm:$0xff]
        %v409 = vld [vmem:[%s1 + $0x98] sm:$0xff]
        %v410 = vld [vmem:[%s1 + $0xa0] sm:$0xff]
        %v411 = vld [vmem:[%s1 + $0xa8] sm:$0xff]
        %v412 = vld [vmem:[%s1 + $0xb0] sm:$0xff]
        %v413 = vld [vmem:[%s1 + $0xb8] sm:$0xff]
        %v414 = vld [vmem:[%s1 + $0xc0] sm:$0xff]
        %v415 = vld [vmem:[%s1 + $0xc8] sm:$0xff]
        %v416 = vld [vmem:[%s1 + $0xd0] sm:$0xff]
        %v417 = vld [vmem:[%s1 + $0xd8] sm:$0xff]
        %v418 = vld [vmem:[%s1 + $0xe0] sm:$0xff]
        %v419 = vld [vmem:[%s1 + $0xe8] sm:$0xff]
        %v420 = vld [vmem:[%s1 + $0xf0] sm:$0xff]
        %v421 = vld [vmem:[%s1 + $0xf8] sm:$0xff]
        %v422 = vld [vmem:[%s2] sm:$0x3]
        %v424 = vperm.slane %v422, 0
        %v425 = vperm.slane %v422, 1
        %v460 = vunpack.c.l.b16 %v390
        %v461 = vunpack.c.h.b16 %v390
        %v462 = vunpack.c.l.b16 %v391
        %v463 = vunpack.c.h.b16 %v391
        %v464 = vunpack.c.l.b16 %v392
        %v465 = vunpack.c.h.b16 %v392
        %v466 = vunpack.c.l.b16 %v393
        %v467 = vunpack.c.h.b16 %v393
        %v468 = vunpack.c.l.b16 %v394
        %v469 = vunpack.c.h.b16 %v394
        %v470 = vunpack.c.l.b16 %v395
        %v471 = vunpack.c.h.b16 %v395
        %v472 = vunpack.c.l.b16 %v396
        %v473 = vunpack.c.h.b16 %v396
        %v474 = vunpack.c.l.b16 %v397
        %v475 = vunpack.c.h.b16 %v397
        %v476 = vunpack.c.l.b16 %v398
        %v477 = vunpack.c.h.b16 %v398
        %v478 = vunpack.c.l.b16 %v399
        %v479 = vunpack.c.h.b16 %v399
        %v480 = vunpack.c.l.b16 %v400
        %v481 = vunpack.c.h.b16 %v400
        %v482 = vunpack.c.l.b16 %v401
        %v483 = vunpack.c.h.b16 %v401
        %v484 = vunpack.c.l.b16 %v402
        %v485 = vunpack.c.h.b16 %v402
        %v486 = vunpack.c.l.b16 %v403
        %v487 = vunpack.c.h.b16 %v403
        %v488 = vunpack.c.l.b16 %v404
        %v489 = vunpack.c.h.b16 %v404
        %v490 = vunpack.c.l.b16 %v405
        %v491 = vunpack.c.h.b16 %v405
        %v492 = vunpack.c.l.b16 %v406
        %v493 = vunpack.c.h.b16 %v406
        %v494 = vunpack.c.l.b16 %v407
        %v495 = vunpack.c.h.b16 %v407
        %v496 = vunpack.c.l.b16 %v408
        %v497 = vunpack.c.h.b16 %v408
        %v498 = vunpack.c.l.b16 %v409
        %v499 = vunpack.c.h.b16 %v409
        %v500 = vunpack.c.l.b16 %v410
        %v501 = vunpack.c.h.b16 %v410
        %v502 = vunpack.c.l.b16 %v411
        %v503 = vunpack.c.h.b16 %v411
        %v504 = vunpack.c.l.b16 %v412
        %v505 = vunpack.c.h.b16 %v412
        %v506 = vunpack.c.l.b16 %v413
        %v507 = vunpack.c.h.b16 %v413
        %v508 = vunpack.c.l.b16 %v414
        %v509 = vunpack.c.h.b16 %v414
        %v510 = vunpack.c.l.b16 %v415
        %v511 = vunpack.c.h.b16 %v415
        %v512 = vunpack.c.l.b16 %v416
        %v513 = vunpack.c.h.b16 %v416
        %v514 = vunpack.c.l.b16 %v417
        %v515 = vunpack.c.h.b16 %v417
        %v516 = vunpack.c.l.b16 %v418
        %v517 = vunpack.c.h.b16 %v418
        %v518 = vunpack.c.l.b16 %v419
        %v519 = vunpack.c.h.b16 %v419
        %v520 = vunpack.c.l.b16 %v420
        %v521 = vunpack.c.h.b16 %v420
        %v522 = vunpack.c.l.b16 %v421
        %v523 = vunpack.c.h.b16 %v421
        %v524 = vpack.c.b16 %v462, %v460
        %v525 = vpack.c.b16 %v463, %v461
        %v526 = vpack.c.b16 %v466, %v464
        %v527 = vpack.c.b16 %v467, %v465
        %v528 = vpack.c.b16 %v470, %v468
        %v529 = vpack.c.b16 %v471, %v469
        %v530 = vpack.c.b16 %v474, %v472
        %v531 = vpack.c.b16 %v475, %v473
        %v532 = vpack.c.b16 %v478, %v476
        %v533 = vpack.c.b16 %v479, %v477
        %v534 = vpack.c.b16 %v482, %v480
        %v535 = vpack.c.b16 %v483, %v481
        %v536 = vpack.c.b16 %v486, %v484
        %v537 = vpack.c.b16 %v487, %v485
        %v538 = vpack.c.b16 %v490, %v488
        %v539 = vpack.c.b16 %v491, %v489
        %v540 = vpack.c.b16 %v494, %v492
        %v541 = vpack.c.b16 %v495, %v493
        %v542 = vpack.c.b16 %v498, %v496
        %v543 = vpack.c.b16 %v499, %v497
        %v544 = vpack.c.b16 %v502, %v500
        %v545 = vpack.c.b16 %v503, %v501
        %v546 = vpack.c.b16 %v506, %v504
        %v547 = vpack.c.b16 %v507, %v505
        %v548 = vpack.c.b16 %v510, %v508
        %v549 = vpack.c.b16 %v511, %v509
        %v550 = vpack.c.b16 %v514, %v512
        %v551 = vpack.c.b16 %v515, %v513
        %v552 = vpack.c.b16 %v518, %v516
        %v553 = vpack.c.b16 %v519, %v517
        %v554 = vpack.c.b16 %v522, %v520
        %v555 = vpack.c.b16 %v523, %v521
        %588 = vmatpush.bf16.msra.mxu0 %v538
        %589 = vmatpush.bf16.msra.mxu0 %v536
        %590 = vmatpush.bf16.msra.mxu0 %v534
        %591 = vmatpush.bf16.msra.mxu0 %v532
        %592 = vmatpush.bf16.msra.mxu0 %v530
        %593 = vmatpush.bf16.msra.mxu0 %v528
        %594 = vmatpush.bf16.msra.mxu0 %v526
        %595 = vmatpush.bf16.msra.mxu0 %v524
        %596 = vmatmul.bf16.gmra.mxu0 %v388
        %v597 = vpop.f32.mrf.mxu0
        %v598 = vadd.f32 %v424, %v597
        %v599 = vpop.f32.mrf.mxu0
        %600 = vdwg.mxu0
        %601 = vmatpush.bf16.msra.mxu0 %v554
        %602 = vmatpush.bf16.msra.mxu0 %v552
        %603 = vmatpush.bf16.msra.mxu0 %v550
        %604 = vmatpush.bf16.msra.mxu0 %v548
        %605 = vmatpush.bf16.msra.mxu0 %v546
        %606 = vmatpush.bf16.msra.mxu0 %v544
        %607 = vmatpush.bf16.msra.mxu0 %v542
        %608 = vmatpush.bf16.msra.mxu0 %v540
        %609 = vmatmul.bf16.gmra.mxu0 %v389
        %v610 = vpop.f32.mrf.mxu0
        %v611 = vadd.f32 %v598, %v610
        %v612 = vpop.f32.mrf.mxu0
        %613 = vdwg.mxu0
        %614 = vmatpush.bf16.msra.mxu0 %v539
        %615 = vmatpush.bf16.msra.mxu0 %v537
        %616 = vmatpush.bf16.msra.mxu0 %v535
        %617 = vmatpush.bf16.msra.mxu0 %v533
        %618 = vmatpush.bf16.msra.mxu0 %v531
        %619 = vmatpush.bf16.msra.mxu0 %v529
        %620 = vmatpush.bf16.msra.mxu0 %v527
        %621 = vmatpush.bf16.msra.mxu0 %v525
        %622 = vmatmul.bf16.gmra.mxu0 %v388
        %v623 = vpop.f32.mrf.mxu0
        %v624 = vadd.f32 %v425, %v623
        %v625 = vpop.f32.mrf.mxu0
        %626 = vdwg.mxu0
        %627 = vmatpush.bf16.msra.mxu0 %v555
        %628 = vmatpush.bf16.msra.mxu0 %v553
        %629 = vmatpush.bf16.msra.mxu0 %v551
        %630 = vmatpush.bf16.msra.mxu0 %v549
        %631 = vmatpush.bf16.msra.mxu0 %v547
        %632 = vmatpush.bf16.msra.mxu0 %v545
        %633 = vmatpush.bf16.msra.mxu0 %v543
        %634 = vmatpush.bf16.msra.mxu0 %v541
        %635 = vmatmul.bf16.gmra.mxu0 %v389
        %v636 = vpop.f32.mrf.mxu0
        %v637 = vadd.f32 %v624, %v636
        %v638 = vpop.f32.mrf.mxu0
        %639 = vdwg.mxu0
        %641 = vrot.lane.b32.xlu0 %v611, 64
        %v642 = vpop.permute.xlu0 %641
        %vm643 = vcmask 523264
        %v644 = vsel %vm643, %v611, 0
        %v646 = vsel %vm643, %v642, 0
        %648 = vmatpush.xpose.msra.mxu0 0.0
        %649 = vmatpush.xpose.msra.mxu0 0.0
        %650 = vmatpush.xpose.msra.mxu0 0.0
        %651 = vmatpush.xpose.msra.mxu0 0.0
        %652 = vmatpush.xpose.msra.mxu0 0.0
        %653 = vmatpush.xpose.msra.mxu0 0.0
        %654 = vmatpush.xpose.msra.mxu0 0.0
        %655 = vmatpush.xpose.msra.mxu0 0.0
        %656 = vmatpush.xpose.msra.mxu0 0.0
        %657 = vmatpush.xpose.msra.mxu0 0.0
        %658 = vmatpush.xpose.msra.mxu0 0.0
        %659 = vmatpush.xpose.msra.mxu0 0.0
        %660 = vmatpush.xpose.msra.mxu0 0.0
        %661 = vmatpush.xpose.msra.mxu0 0.0
        %662 = vmatpush.xpose.msra.mxu0 0.0
        %663 = vmatpush.xpose.msra.mxu0 %v646
        %664 = vmatmul.f32.gmra.mxu0 %v644
        %v665 = vpop.f32.mrf.mxu0
        %v666 = vadd.f32 0.0, %v665
        %667 = vdwg.mxu0
        %v668 = vmul.f32 %v666, 0.125
        %vm669 = vcmask 64512
        %v670 = vsel %vm669, %v668, -inf
        %671 = vmax.xlane.f32.xlu0 %v670
        %v672 = vpop.xlane.xlu0 %671
        %v673 = vsub.f32 %v668, %v672
        %v674 = vmul.f32 %v673, 1.442695
        %v675 = vpow.pop %v674
        %v676 = vsel %vm669, %v675, 0.0
        %677 = vadd.xlane.f32.xlu0 %v676
        %v678 = vpop.xlane.xlu0 %677
        %v679 = vrcp.pop %v678
        %v680 = vmul.f32 %v675, %v679
        %v682 = vsel %vm669, %v680, 0
        %684 = vmatpush.msra.mxu0 0.0
        %685 = vmatpush.msra.mxu0 0.0
        %686 = vmatpush.msra.mxu0 0.0
        %687 = vmatpush.msra.mxu0 0.0
        %688 = vmatpush.msra.mxu0 0.0
        %689 = vmatpush.msra.mxu0 0.0
        %690 = vmatpush.msra.mxu0 0.0
        %691 = vmatpush.msra.mxu0 0.0
        %692 = vmatpush.msra.mxu0 0.0
        %693 = vmatpush.msra.mxu0 0.0
        %694 = vmatpush.msra.mxu0 0.0
        %695 = vmatpush.msra.mxu0 0.0
        %696 = vmatpush.msra.mxu0 0.0
        %697 = vmatpush.msra.mxu0 0.0
        %698 = vmatpush.msra.mxu0 0.0
        %699 = vmatpush.msra.mxu0 %v637
        %700 = vmatmul.f32.gmra.mxu0 %v682
        %v701 = vpop.f32.mrf.mxu0
        %v702 = vadd.f32 0.0, %v701
        %703 = vdwg.mxu0
        %704 = vst [vmem:[#allocation2] sm:$0xff] 0.0
        %706 = vrot.lane.b32.xlu0 %v702, 16
        %v707 = vpop.permute.xlu0 %706
        %vm709 = vcmask 654464
        %710 = vst.msk [vmem:[#allocation2] sm:$0xff] %vm709, %v707
        %v711 = vlaneseq
        %v712 = vand.u32 %v711, 127
        %vm713 = vcmp.lt.s32.totalorder %v712, 0
        %v714 = vsub.s32 0, %v712
        %v715 = vsel %vm713, %v714, %v712
        %v716 = vshrl.u32 %v715, 3
        %v717 = vand.u32 %v715, 7
        %v718 = vsub.s32 0, %v717
        %v719 = vsel %vm713, %v718, %v717
        %vm720 = vcmp.ne.s32.totalorder %v719, 0
        %vm721 = vcmp.lt.s32.totalorder %v719, 0
        %vm722 = vmand %vm721, %vm720
        %v723 = vadd.s32 %v719, 8
        %v724 = vsel %vm722, %v723, %v719
        %vm725 = vcmp.ge.s32.totalorder %v724, 1
        %vm726 = vcmp.le.s32.totalorder %v724, 6
        %v727 = vld [vmem:[#allocation2] sm:$0xff]
        %729 = vrot.lane.b32.xlu0 %v727, 121
        %v730 = vpop.permute.xlu0 %729
        %v732 = vsel %vm725, %v730, 0.0
        %733 = vrot.lane.b32.xlu0 %v727, 119
        %v734 = vpop.permute.xlu0 %733
        %v736 = vsel %vm726, %v734, 0.0
        %737 = vrot.lane.b32.xlu0 %v727, 113
        %v738 = vpop.permute.xlu0 %737
        %v740 = vsel %vm725, %v738, 0.0
        %741 = vrot.lane.b32.xlu0 %v727, 111
        %v742 = vpop.permute.xlu0 %741
        %v744 = vsel %vm726, %v742, 0.0
        %745 = vrot.lane.b32.xlu0 %v727, 105
        %v746 = vpop.permute.xlu0 %745
        %v748 = vsel %vm725, %v746, 0.0
        %749 = vrot.lane.b32.xlu0 %v727, 103
        %v750 = vpop.permute.xlu0 %749
        %v752 = vsel %vm726, %v750, 0.0
        %v753 = vld [vmem:[%s3] sm:$0xff]
        %v754 = vld [vmem:[%s4] sm:$0xff]
        %756 = vset.pattern.permute.xlu0 0
        %757 = vperm.xlu0 %756, %v753
        %v758 = vpop.permute.xlu0 %757
        %v760 = vmul.f32 %v758, %v732
        %v761 = vadd.f32 %v760, 0.0
        %762 = vset.pattern.permute.xlu0 4
        %763 = vperm.xlu0 %762, %v753
        %v764 = vpop.permute.xlu0 %763
        %v766 = vmul.f32 %v764, %v727
        %768 = vrot.lane.b32.xlu0 %v766, 120
        %v769 = vpop.permute.xlu0 %768
        %v771 = vadd.f32 %v761, %v769
        %772 = vset.pattern.permute.xlu0 8
        %773 = vperm.xlu0 %772, %v753
        %v774 = vpop.permute.xlu0 %773
        %v776 = vmul.f32 %v774, %v736
        %v777 = vadd.f32 %v771, %v776
        %778 = vset.pattern.permute.xlu0 12
        %779 = vperm.xlu0 %778, %v753
        %v780 = vpop.permute.xlu0 %779
        %v782 = vmul.f32 %v780, %v740
        %v783 = vadd.f32 %v777, %v782
        %784 = vset.pattern.permute.xlu0 16
        %785 = vperm.xlu0 %784, %v753
        %v786 = vpop.permute.xlu0 %785
        %v788 = vmul.f32 %v786, %v727
        %790 = vrot.lane.b32.xlu0 %v788, 112
        %v791 = vpop.permute.xlu0 %790
        %v793 = vadd.f32 %v783, %v791
        %794 = vset.pattern.permute.xlu0 20
        %795 = vperm.xlu0 %794, %v753
        %v796 = vpop.permute.xlu0 %795
        %v798 = vmul.f32 %v796, %v744
        %v799 = vadd.f32 %v793, %v798
        %800 = vset.pattern.permute.xlu0 24
        %801 = vperm.xlu0 %800, %v753
        %v802 = vpop.permute.xlu0 %801
        %v804 = vmul.f32 %v802, %v748
        %v805 = vadd.f32 %v799, %v804
        %806 = vset.pattern.permute.xlu0 28
        %807 = vperm.xlu0 %806, %v753
        %v808 = vpop.permute.xlu0 %807
        %v810 = vmul.f32 %v808, %v727
        %812 = vrot.lane.b32.xlu0 %v810, 104
        %v813 = vpop.permute.xlu0 %812
        %v815 = vadd.f32 %v805, %v813
        %816 = vset.pattern.permute.xlu0 32
        %817 = vperm.xlu0 %816, %v753
        %v818 = vpop.permute.xlu0 %817
        %v820 = vmul.f32 %v818, %v752
        %v821 = vadd.f32 %v815, %v820
        %823 = vset.pattern.permute.xlu0 0
        %824 = vperm.xlu0 %823, %v754
        %v825 = vpop.permute.xlu0 %824
        %v827 = vadd.f32 %v821, %v825
        %828 = vset.pattern.permute.xlu0 1
        %829 = vperm.xlu0 %828, %v753
        %v830 = vpop.permute.xlu0 %829
        %v832 = vmul.f32 %v830, %v732
        %v833 = vadd.f32 %v832, 0.0
        %834 = vset.pattern.permute.xlu0 5
        %835 = vperm.xlu0 %834, %v753
        %v836 = vpop.permute.xlu0 %835
        %v838 = vmul.f32 %v836, %v727
        %840 = vrot.lane.b32.xlu0 %v838, 120
        %v841 = vpop.permute.xlu0 %840
        %v843 = vadd.f32 %v833, %v841
        %844 = vset.pattern.permute.xlu0 9
        %845 = vperm.xlu0 %844, %v753
        %v846 = vpop.permute.xlu0 %845
        %v848 = vmul.f32 %v846, %v736
        %v849 = vadd.f32 %v843, %v848
        %850 = vset.pattern.permute.xlu0 13
        %851 = vperm.xlu0 %850, %v753
        %v852 = vpop.permute.xlu0 %851
        %v854 = vmul.f32 %v852, %v740
        %v855 = vadd.f32 %v849, %v854
        %856 = vset.pattern.permute.xlu0 17
        %857 = vperm.xlu0 %856, %v753
        %v858 = vpop.permute.xlu0 %857
        %v860 = vmul.f32 %v858, %v727
        %862 = vrot.lane.b32.xlu0 %v860, 112
        %v863 = vpop.permute.xlu0 %862
        %v865 = vadd.f32 %v855, %v863
        %866 = vset.pattern.permute.xlu0 21
        %867 = vperm.xlu0 %866, %v753
        %v868 = vpop.permute.xlu0 %867
        %v870 = vmul.f32 %v868, %v744
        %v871 = vadd.f32 %v865, %v870
        %872 = vset.pattern.permute.xlu0 25
        %873 = vperm.xlu0 %872, %v753
        %v874 = vpop.permute.xlu0 %873
        %v876 = vmul.f32 %v874, %v748
        %v877 = vadd.f32 %v871, %v876
        %878 = vset.pattern.permute.xlu0 29
        %879 = vperm.xlu0 %878, %v753
        %v880 = vpop.permute.xlu0 %879
        %v882 = vmul.f32 %v880, %v727
        %884 = vrot.lane.b32.xlu0 %v882, 104
        %v885 = vpop.permute.xlu0 %884
        %v887 = vadd.f32 %v877, %v885
        %888 = vset.pattern.permute.xlu0 33
        %889 = vperm.xlu0 %888, %v753
        %v890 = vpop.permute.xlu0 %889
        %v892 = vmul.f32 %v890, %v752
        %v893 = vadd.f32 %v887, %v892
        %894 = vset.pattern.permute.xlu0 1
        %895 = vperm.xlu0 %894, %v754
        %v896 = vpop.permute.xlu0 %895
        %v898 = vadd.f32 %v893, %v896
        %899 = vset.pattern.permute.xlu0 2
        %900 = vperm.xlu0 %899, %v753
        %v901 = vpop.permute.xlu0 %900
        %v903 = vmul.f32 %v901, %v732
        %v904 = vadd.f32 %v903, 0.0
        %905 = vset.pattern.permute.xlu0 6
        %906 = vperm.xlu0 %905, %v753
        %v907 = vpop.permute.xlu0 %906
        %v909 = vmul.f32 %v907, %v727
        %911 = vrot.lane.b32.xlu0 %v909, 120
        %v912 = vpop.permute.xlu0 %911
        %v914 = vadd.f32 %v904, %v912
        %915 = vset.pattern.permute.xlu0 10
        %916 = vperm.xlu0 %915, %v753
        %v917 = vpop.permute.xlu0 %916
        %v919 = vmul.f32 %v917, %v736
        %v920 = vadd.f32 %v914, %v919
        %921 = vset.pattern.permute.xlu0 14
        %922 = vperm.xlu0 %921, %v753
        %v923 = vpop.permute.xlu0 %922
        %v925 = vmul.f32 %v923, %v740
        %v926 = vadd.f32 %v920, %v925
        %927 = vset.pattern.permute.xlu0 18
        %928 = vperm.xlu0 %927, %v753
        %v929 = vpop.permute.xlu0 %928
        %v931 = vmul.f32 %v929, %v727
        %933 = vrot.lane.b32.xlu0 %v931, 112
        %v934 = vpop.permute.xlu0 %933
        %v936 = vadd.f32 %v926, %v934
        %937 = vset.pattern.permute.xlu0 22
        %938 = vperm.xlu0 %937, %v753
        %v939 = vpop.permute.xlu0 %938
        %v941 = vmul.f32 %v939, %v744
        %v942 = vadd.f32 %v936, %v941
        %943 = vset.pattern.permute.xlu0 26
        %944 = vperm.xlu0 %943, %v753
        %v945 = vpop.permute.xlu0 %944
        %v947 = vmul.f32 %v945, %v748
        %v948 = vadd.f32 %v942, %v947
        %949 = vset.pattern.permute.xlu0 30
        %950 = vperm.xlu0 %949, %v753
        %v951 = vpop.permute.xlu0 %950
        %v953 = vmul.f32 %v951, %v727
        %955 = vrot.lane.b32.xlu0 %v953, 104
        %v956 = vpop.permute.xlu0 %955
        %v958 = vadd.f32 %v948, %v956
        %959 = vset.pattern.permute.xlu0 34
        %960 = vperm.xlu0 %959, %v753
        %v961 = vpop.permute.xlu0 %960
        %v963 = vmul.f32 %v961, %v752
        %v964 = vadd.f32 %v958, %v963
        %965 = vset.pattern.permute.xlu0 2
        %966 = vperm.xlu0 %965, %v754
        %v967 = vpop.permute.xlu0 %966
        %v969 = vadd.f32 %v964, %v967
        %970 = vset.pattern.permute.xlu0 3
        %971 = vperm.xlu0 %970, %v753
        %v972 = vpop.permute.xlu0 %971
        %v974 = vmul.f32 %v972, %v732
        %v975 = vadd.f32 %v974, 0.0
        %976 = vset.pattern.permute.xlu0 7
        %977 = vperm.xlu0 %976, %v753
        %v978 = vpop.permute.xlu0 %977
        %v980 = vmul.f32 %v978, %v727
        %982 = vrot.lane.b32.xlu0 %v980, 120
        %v983 = vpop.permute.xlu0 %982
        %v985 = vadd.f32 %v975, %v983
        %986 = vset.pattern.permute.xlu0 11
        %987 = vperm.xlu0 %986, %v753
        %v988 = vpop.permute.xlu0 %987
        %v990 = vmul.f32 %v988, %v736
        %v991 = vadd.f32 %v985, %v990
        %992 = vset.pattern.permute.xlu0 15
        %993 = vperm.xlu0 %992, %v753
        %v994 = vpop.permute.xlu0 %993
        %v996 = vmul.f32 %v994, %v740
        %v997 = vadd.f32 %v991, %v996
        %998 = vset.pattern.permute.xlu0 19
        %999 = vperm.xlu0 %998, %v753
        %v1000 = vpop.permute.xlu0 %999
        %v1002 = vmul.f32 %v1000, %v727
        %1004 = vrot.lane.b32.xlu0 %v1002, 112
        %v1005 = vpop.permute.xlu0 %1004
        %v1007 = vadd.f32 %v997, %v1005
        %1008 = vset.pattern.permute.xlu0 23
        %1009 = vperm.xlu0 %1008, %v753
        %v1010 = vpop.permute.xlu0 %1009
        %v1012 = vmul.f32 %v1010, %v744
        %v1013 = vadd.f32 %v1007, %v1012
        %1014 = vset.pattern.permute.xlu0 27
        %1015 = vperm.xlu0 %1014, %v753
        %v1016 = vpop.permute.xlu0 %1015
        %v1018 = vmul.f32 %v1016, %v748
        %v1019 = vadd.f32 %v1013, %v1018
        %1020 = vset.pattern.permute.xlu0 31
        %1021 = vperm.xlu0 %1020, %v753
        %v1022 = vpop.permute.xlu0 %1021
        %v1024 = vmul.f32 %v1022, %v727
        %1026 = vrot.lane.b32.xlu0 %v1024, 104
        %v1027 = vpop.permute.xlu0 %1026
        %v1029 = vadd.f32 %v1019, %v1027
        %1030 = vset.pattern.permute.xlu0 35
        %1031 = vperm.xlu0 %1030, %v753
        %v1032 = vpop.permute.xlu0 %1031
        %v1034 = vmul.f32 %v1032, %v752
        %v1035 = vadd.f32 %v1029, %v1034
        %1036 = vset.pattern.permute.xlu0 3
        %1037 = vperm.xlu0 %1036, %v754
        %v1038 = vpop.permute.xlu0 %1037
        %v1040 = vadd.f32 %v1035, %v1038
        %1042 = vrot.lane.b32.xlu0 %v898, 64
        %v1043 = vpop.permute.xlu0 %1042
        %1046 = vrot.lane.b32.xlu0 %v1040, 64
        %v1047 = vpop.permute.xlu0 %1046
        %v1049 = vsel %vm643, %v827, %v1043
        %v1050 = vsel %vm643, %v969, %v1047
        %v1051 = vadd.f32 %v1049, %v386
        %v1052 = vadd.f32 %v1050, %v387
        %v1053 = vld [vmem:[%s5] sm:$0x3]
        %v1054 = vld [vmem:[%s6] sm:$0x3]
        %v1055 = vadd.f32 %v1051, %v1052
        %1056 = vadd.xlane.f32.xlu0 %v1055
        %v1057 = vpop.xlane.xlu0 %1056
        %v1058 = vrcp.pop 256.0
        %v1059 = vmul.f32 256.0, %v1058
        %v1060 = vsub.f32 1.0, %v1059
        %v1061 = vmul.f32 %v1058, %v1060
        %v1062 = vadd.f32 %v1058, %v1061
        %vm1063 = vweird.f32 %v1058
        %v1064 = vsel %vm1063, %v1058, %v1062
        %v1065 = vmul.f32 %v1057, %v1064
        %v1066 = vsub.f32 %v1051, %v1065
        %v1067 = vsub.f32 %v1052, %v1065
        %v1068 = vmul.f32 %v1066, %v1066
        %v1069 = vmul.f32 %v1067, %v1067
        %v1070 = vadd.f32 %v1068, %v1069
        %1071 = vadd.xlane.f32.xlu0 %v1070
        %v1072 = vpop.xlane.xlu0 %1071
        %v1073 = vmul.f32 %v1072, %v1064
        %v1074 = vadd.f32 %v1073, 1e-05
        %v1075 = vrsqrt.pop %v1074
        %v1076 = vmul.f32 %v1075, %v1074
        %v1077 = vmul.f32 %v1076, %v1075
        %v1078 = vmul.f32 0.5, %v1077
        %v1079 = vsub.f32 1.5, %v1078
        %v1080 = vmul.f32 %v1075, %v1079
        %vm1081 = vweird.f32 %v1074
        %vm1082 = vweird.f32 %v1075
        %vm1083 = vmor %vm1081, %vm1082
        %v1084 = vsel %vm1083, %v1075, %v1080
        %v1085 = vmul.f32 %v1066, %v1084
        %v1086 = vmul.f32 %v1067, %v1084
        %v1088 = vperm.slane %v1053, 0
        %v1089 = vperm.slane %v1053, 1
        %v1092 = vmul.f32 %v1085, %v1088
        %v1093 = vmul.f32 %v1086, %v1089
        %v1095 = vperm.slane %v1054, 0
        %v1096 = vperm.slane %v1054, 1
        %v1099 = vadd.f32 %v1092, %v1095
        %v1100 = vadd.f32 %v1093, %v1096
        %1101 = vst [vmem:[#allocation3] sm:$0xff] 0.0
        %1102 = vst [vmem:[#allocation3 + $0x8] sm:$0xff] 0.0
        %1103 = vst [vmem:[#allocation3 + $0x10] sm:$0xff] 0.0
        %1106 = vrot.lane.b32.xlu0 %v1099, 24
        %v1107 = vpop.permute.xlu0 %1106
        %1108 = vrot.lane.b32.xlu0 %v1100, 24
        %v1109 = vpop.permute.xlu0 %1108
        %vm1110 = vcmask 195584
        %v1111 = vsel %vm1110, %v1107, %v1109
        %vm1115 = vcmask 1047744
        %1116 = vst.msk [vmem:[#allocation3] sm:$0xff] %vm1115, %v1107
        %1117 = vst [vmem:[#allocation3 + $0x8] sm:$0xff] %v1111
        %1118 = vst.msk [vmem:[#allocation3 + $0x10] sm:$0xff] %vm1110, %v1109
        %v1119 = vadd.s32 %v712, 128
        %vm1120 = vcmp.lt.s32.totalorder %v712, 0
        %v1121 = vsub.s32 0, %v712
        %v1122 = vsel %vm1120, %v1121, %v712
        %v1123 = vshrl.u32 %v1122, 4
        %v1124 = vand.u32 %v1122, 15
        %v1125 = vsub.s32 0, %v1124
        %v1126 = vsel %vm1120, %v1125, %v1124
        %vm1127 = vcmp.lt.s32.totalorder %v1119, 0
        %v1128 = vsub.s32 0, %v1119
        %v1129 = vsel %vm1127, %v1128, %v1119
        %v1130 = vshrl.u32 %v1129, 4
        %v1131 = vand.u32 %v1129, 15
        %v1132 = vsub.s32 0, %v1131
        %v1133 = vsel %vm1127, %v1132, %v1131
        %vm1134 = vcmp.ne.s32.totalorder %v1126, 0
        %vm1135 = vcmp.ne.s32.totalorder %v1133, 0
        %vm1136 = vcmp.lt.s32.totalorder %v1126, 0
        %vm1137 = vcmp.lt.s32.totalorder %v1133, 0
        %vm1138 = vmand %vm1136, %vm1134
        %vm1139 = vmand %vm1137, %vm1135
        %v1140 = vadd.s32 %v1126, 16
        %v1141 = vadd.s32 %v1133, 16
        %v1142 = vsel %vm1138, %v1140, %v1126
        %v1143 = vsel %vm1139, %v1141, %v1133
        %vm1144 = vcmp.ge.s32.totalorder %v1142, 1
        %vm1145 = vcmp.ge.s32.totalorder %v1143, 1
        %vm1146 = vcmp.le.s32.totalorder %v1142, 14
        %vm1147 = vcmp.le.s32.totalorder %v1143, 14
        %v1148 = vld [vmem:[#allocation3] sm:$0xff]
        %v1149 = vld [vmem:[#allocation3 + $0x8] sm:$0xff]
        %v1150 = vld [vmem:[#allocation3 + $0x10] sm:$0xff]
        %1154 = vrot.lane.b32.xlu0 %v1148, 121
        %v1155 = vpop.permute.xlu0 %1154
        %1156 = vrot.lane.b32.xlu0 %v1149, 121
        %v1157 = vpop.permute.xlu0 %1156
        %1158 = vrot.lane.b32.xlu0 %v1150, 121
        %v1159 = vpop.permute.xlu0 %1158
        %vm1160 = vcmask 990208
        %v1161 = vsel %vm1160, %v1155, %v1157
        %v1162 = vsel %vm1160, %v1157, %v1159
        %v1165 = vsel %vm1144, %v1161, 0.0
        %v1166 = vsel %vm1145, %v1162, 0.0
        %1167 = vrot.lane.b32.xlu0 %v1148, 119
        %v1168 = vpop.permute.xlu0 %1167
        %1169 = vrot.lane.b32.xlu0 %v1149, 119
        %v1170 = vpop.permute.xlu0 %1169
        %1171 = vrot.lane.b32.xlu0 %v1150, 119
        %v1172 = vpop.permute.xlu0 %1171
        %vm1173 = vcmask 973824
        %v1174 = vsel %vm1173, %v1168, %v1170
        %v1175 = vsel %vm1173, %v1170, %v1172
        %v1178 = vsel %vm1146, %v1174, 0.0
        %v1179 = vsel %vm1147, %v1175, 0.0
        %1180 = vrot.lane.b32.xlu0 %v1148, 105
        %v1181 = vpop.permute.xlu0 %1180
        %1182 = vrot.lane.b32.xlu0 %v1149, 105
        %v1183 = vpop.permute.xlu0 %1182
        %1184 = vrot.lane.b32.xlu0 %v1150, 105
        %v1185 = vpop.permute.xlu0 %1184
        %vm1186 = vcmask 859136
        %v1187 = vsel %vm1186, %v1181, %v1183
        %v1188 = vsel %vm1186, %v1183, %v1185
        %v1191 = vsel %vm1144, %v1187, 0.0
        %v1192 = vsel %vm1145, %v1188, 0.0
        %1193 = vrot.lane.b32.xlu0 %v1148, 103
        %v1194 = vpop.permute.xlu0 %1193
        %1195 = vrot.lane.b32.xlu0 %v1149, 103
        %v1196 = vpop.permute.xlu0 %1195
        %1197 = vrot.lane.b32.xlu0 %v1150, 103
        %v1198 = vpop.permute.xlu0 %1197
        %vm1199 = vcmask 842752
        %v1200 = vsel %vm1199, %v1194, %v1196
        %v1201 = vsel %vm1199, %v1196, %v1198
        %v1204 = vsel %vm1146, %v1200, 0.0
        %v1205 = vsel %vm1147, %v1201, 0.0
        %1206 = vrot.lane.b32.xlu0 %v1148, 89
        %v1207 = vpop.permute.xlu0 %1206
        %1208 = vrot.lane.b32.xlu0 %v1149, 89
        %v1209 = vpop.permute.xlu0 %1208
        %1210 = vrot.lane.b32.xlu0 %v1150, 89
        %v1211 = vpop.permute.xlu0 %1210
        %vm1212 = vcmask 728064
        %v1213 = vsel %vm1212, %v1207, %v1209
        %v1214 = vsel %vm1212, %v1209, %v1211
        %v1217 = vsel %vm1144, %v1213, 0.0
        %v1218 = vsel %vm1145, %v1214, 0.0
        %1219 = vrot.lane.b32.xlu0 %v1148, 87
        %v1220 = vpop.permute.xlu0 %1219
        %1221 = vrot.lane.b32.xlu0 %v1149, 87
        %v1222 = vpop.permute.xlu0 %1221
        %1223 = vrot.lane.b32.xlu0 %v1150, 87
        %v1224 = vpop.permute.xlu0 %1223
        %vm1225 = vcmask 711680
        %v1226 = vsel %vm1225, %v1220, %v1222
        %v1227 = vsel %vm1225, %v1222, %v1224
        %v1230 = vsel %vm1146, %v1226, 0.0
        %v1231 = vsel %vm1147, %v1227, 0.0
        %1232 = vrot.lane.b32.xlu0 %v1148, 120
        %v1233 = vpop.permute.xlu0 %1232
        %1234 = vrot.lane.b32.xlu0 %v1149, 120
        %v1235 = vpop.permute.xlu0 %1234
        %1236 = vrot.lane.b32.xlu0 %v1150, 120
        %v1237 = vpop.permute.xlu0 %1236
        %vm1238 = vcmask 982016
        %v1239 = vsel %vm1238, %v1233, %v1235
        %v1240 = vsel %vm1238, %v1235, %v1237
        %1243 = vrot.lane.b32.xlu0 %v1148, 104
        %v1244 = vpop.permute.xlu0 %1243
        %1245 = vrot.lane.b32.xlu0 %v1149, 104
        %v1246 = vpop.permute.xlu0 %1245
        %1247 = vrot.lane.b32.xlu0 %v1150, 104
        %v1248 = vpop.permute.xlu0 %1247
        %vm1249 = vcmask 850944
        %v1250 = vsel %vm1249, %v1244, %v1246
        %v1251 = vsel %vm1249, %v1246, %v1248
        %1254 = vrot.lane.b32.xlu0 %v1148, 88
        %v1255 = vpop.permute.xlu0 %1254
        %1256 = vrot.lane.b32.xlu0 %v1149, 88
        %v1257 = vpop.permute.xlu0 %1256
        %1258 = vrot.lane.b32.xlu0 %v1150, 88
        %v1259 = vpop.permute.xlu0 %1258
        %vm1260 = vcmask 719872
        %v1261 = vsel %vm1260, %v1255, %v1257
        %v1262 = vsel %vm1260, %v1257, %v1259
        %v1265 = vpack.c.bf16 %v1239, %v1165
        %v1266 = vpack.c.bf16 %v1240, %v1166
        %v1267 = vpack.c.bf16 %v1191, %v1178
        %v1268 = vpack.c.bf16 %v1192, %v1179
        %v1269 = vpack.c.bf16 %v1204, %v1250
        %v1270 = vpack.c.bf16 %v1205, %v1251
        %v1271 = vpack.c.bf16 %v1261, %v1217
        %v1272 = vpack.c.bf16 %v1262, %v1218
        %v1273 = vpack.c.bf16 %v1230, %v1230
        %v1274 = vpack.c.bf16 %v1231, %v1231
        %v1275 = vld [vmem:[%s7] sm:$0xf]
        %v1276 = vld [vmem:[%s8] sm:$0xff]
        %1278 = vset.pattern.permute.xlu0 0
        %1279 = vperm.xlu0 %1278, %v1276
        %v1280 = vpop.permute.xlu0 %1279
        %vm1282 = vcmask 588800
        %v1284 = vsel %vm1282, %v1275, 0
        %vm1286 = vcmask 1043456
        %v1288 = vsel %vm1286, %v1273, 0
        %v1291 = vsel %vm1286, %v1274, 0
        %1293 = vmatpush.bf16.msra.mxu0 0
        %1294 = vmatpush.bf16.msra.mxu0 0
        %1295 = vmatpush.bf16.msra.mxu0 0
        %1296 = vmatpush.bf16.msra.mxu0 %v1288
        %1297 = vmatpush.bf16.msra.mxu0 %v1271
        %1298 = vmatpush.bf16.msra.mxu0 %v1269
        %1299 = vmatpush.bf16.msra.mxu0 %v1267
        %1300 = vmatpush.bf16.msra.mxu0 %v1265
        %1301 = vmatmul.bf16.gmra.mxu0 %v1284
        %v1302 = vpop.f32.mrf.mxu0
        %v1303 = vadd.f32 %v1280, %v1302
        %v1304 = vpop.f32.mrf.mxu0
        %1305 = vdwg.mxu0
        %1306 = vmatpush.bf16.msra.mxu0 0
        %1307 = vmatpush.bf16.msra.mxu0 0
        %1308 = vmatpush.bf16.msra.mxu0 0
        %1309 = vmatpush.bf16.msra.mxu0 %v1291
        %1310 = vmatpush.bf16.msra.mxu0 %v1272
        %1311 = vmatpush.bf16.msra.mxu0 %v1270
        %1312 = vmatpush.bf16.msra.mxu0 %v1268
        %1313 = vmatpush.bf16.msra.mxu0 %v1266
        %1314 = vmatmul.bf16.gmra.mxu0 %v1284
        %v1315 = vpop.f32.mrf.mxu0
        %v1316 = vadd.f32 %v1280, %v1315
        %v1317 = vpop.f32.mrf.mxu0
        %1318 = vdwg.mxu0
        %v1319 = vadd.f32 %v1099, %v1303
        %v1320 = vadd.f32 %v1100, %v1316
        %v1321 = vld [vmem:[%s9] sm:$0x3]
        %v1322 = vld [vmem:[%s10] sm:$0x3]
        %v1323 = vadd.f32 %v1319, %v1320
        %1324 = vadd.xlane.f32.xlu0 %v1323
        %v1325 = vpop.xlane.xlu0 %1324
        %v1326 = vmul.f32 %v1325, %v1064
        %v1327 = vsub.f32 %v1319, %v1326
        %v1328 = vsub.f32 %v1320, %v1326
        %v1329 = vmul.f32 %v1327, %v1327
        %v1330 = vmul.f32 %v1328, %v1328
        %v1331 = vadd.f32 %v1329, %v1330
        %1332 = vadd.xlane.f32.xlu0 %v1331
        %v1333 = vpop.xlane.xlu0 %1332
        %v1334 = vmul.f32 %v1333, %v1064
        %v1335 = vadd.f32 %v1334, 1e-05
        %v1336 = vrsqrt.pop %v1335
        %v1337 = vmul.f32 %v1336, %v1335
        %v1338 = vmul.f32 %v1337, %v1336
        %v1339 = vmul.f32 0.5, %v1338
        %v1340 = vsub.f32 1.5, %v1339
        %v1341 = vmul.f32 %v1336, %v1340
        %vm1342 = vweird.f32 %v1335
        %vm1343 = vweird.f32 %v1336
        %vm1344 = vmor %vm1342, %vm1343
        %v1345 = vsel %vm1344, %v1336, %v1341
        %v1346 = vmul.f32 %v1327, %v1345
        %v1347 = vmul.f32 %v1328, %v1345
        %v1349 = vperm.slane %v1321, 0
        %v1350 = vperm.slane %v1321, 1
        %v1353 = vmul.f32 %v1346, %v1349
        %v1354 = vmul.f32 %v1347, %v1350
        %v1356 = vperm.slane %v1322, 0
        %v1357 = vperm.slane %v1322, 1
        %v1360 = vadd.f32 %v1353, %v1356
        %v1361 = vadd.f32 %v1354, %v1357
        %1362 = vst [vmem:[%s379] sm:$0xff] %v1360
        %1363 = vst [vmem:[%s379 + $0x8] sm:$0xff] %v1361
        %s1364 = sand.u32 %s269, 1
        %s1365 = scalar_lea.sflag [#allocation5], %s1364
        %s1366 = sand.u32 %s269, 1
        %s1367 = smul.addr %s1366, 16
        %s1368 = scalar_lea.vmem [#allocation4], %s1367
        // Predicated region
        $region65: #{tpu_custom_call.1} parent=63 // pred_check
          %p1369 = pneg %p279
        $region66: #{tpu_custom_call.1} parent=63 // pred_check_branch
          %1371 = sbr.rel (%p1369) target = $region68
        $region67: #{tpu_custom_call.1} parent=63 // pred_region
          %1373 = vsyncadd %s1365, 0
          %s1374 = smul.addr %s25, 2
          %s1375 = smul.addr %s1374, 8
          %s1376 = scalar_lea.hbm %s11, %s1375
          %s1378 = sshll.u32 %s1368, 4
          %s1379 = int_to_ptr.vmem [resolvable:$true] %s1378
          %s1380 = sshll.u32 %s1376, 4
          %s1381 = int_to_ptr.hbm [resolvable:$true] %s1380
          %1383 = dma.vmem_to_hbm [thread:$0]  %s1379, 256, %s1381, %s1365
        $region68: #{tpu_custom_call.1} parent=63 // pred_fallthru
          _
      $region64: #{tpu_custom_call.1} parent=5 // pred_fallthru
        _
      %p1384 = scmp.le.s32.totalorder 2, %s20
      // Predicated region
      $region69: #{tpu_custom_call.1} parent=5 // pred_check
        %p1385 = pneg %p1384
      $region70: #{tpu_custom_call.1} parent=5 // pred_check_branch
        %1387 = sbr.rel (%p1385) target = $region72
      $region71: #{tpu_custom_call.1} parent=5 // pred_region
        %s1388 = ssub.s32 %s20, 2
        // Predicated region
        $region73: #{tpu_custom_call.1} parent=71 // pred_check
          %p1389 = pneg %p285
        $region74: #{tpu_custom_call.1} parent=71 // pred_check_branch
          %1391 = sbr.rel (%p1389) target = $region76
        $region75: #{tpu_custom_call.1} parent=71 // pred_region
          %s1392 = sand.u32 %s270, 1
          %s1393 = scalar_lea.sflag [#allocation5], %s1392
          %s1394 = sand.u32 %s270, 1
          %s1395 = smul.addr %s1394, 16
          %s1396 = scalar_lea.vmem [#allocation4], %s1395
          %1398 = dma.done %s1393, 256
        $region76: #{tpu_custom_call.1} parent=71 // pred_fallthru
          _
      $region72: #{tpu_custom_call.1} parent=5 // pred_fallthru
        _
    $region6: #{tpu_custom_call.1} parent=1 // loop_footer
      %s24 = sadd.s32 1, %s20
    $region7: #{tpu_custom_call.1} parent=1 // loop_footer_branch
      %19 = sbr.rel target = $region3
    $region8: #{tpu_custom_call.1} parent=1 // loop_exit
      _
    %1399 = vsyncpa [#allocation5], 1
    %s1400 = scalar_lea.sflag [#allocation5], 1
    %1401 = vsyncpa %s1400, 1

</llo_original>
